<compile_context>
chip_gen: v5e
topology: v5e:2x2
jax: 0.10.0
libtpu: 0.0.40
codegen_flags: <defaults>
</compile_context>

<pallas_src>
import functools

import jax
import jax.numpy as jnp
import numpy as np
from jax.experimental import pallas as pl
from jax.experimental.pallas import tpu as pltpu

_LANE = 128
# Finite "minus infinity": padded logit lanes vanish in the per-group softmax
# (exp underflows to 0) and (-1e30 * 0.0) stays 0.0 (no NaN) in the gather
# matmul, unlike a true -inf.
_NEG_PAD = -1e30


def _round_up(x, m):
    return ((x + m - 1) // m) * m


def _group_log_softmax(logits, num_models, ks_pad):
    """Per-sub-model log_softmax on a (tb, M*ks_pad) tile.

    ks_pad is a multiple of 128, so every slice / concat below is vreg-aligned
    (no masked loads/stores, no cross-lane shuffles)."""
    parts = []
    for m in range(num_models):
        lg = logits[:, m * ks_pad:(m + 1) * ks_pad]          # lane-aligned slice
        mx = jnp.max(lg, axis=-1, keepdims=True)
        sh = lg - mx
        lse = jnp.log(jnp.sum(jnp.exp(sh), axis=-1, keepdims=True))
        parts.append(sh - lse)
    return jnp.concatenate(parts, axis=-1)                   # lane-aligned concat


def _hier_kernel(x_ref, w_ref, b_ref, g_ref, out_ref, *scratch, num_models,
                 ks_pad, n_k):
    """Grid = (batch tiles [parallel], D-reduction tiles [arbitrary]).

    x_ref:   (tb, dk)          bf16
    w_ref:   (dk, M*ks_pad)    bf16  (stacked, lane-padded sub-model weights)
    b_ref:   (1, M*ks_pad)     f32   (stacked biases; padded lanes = -1e30)
    g_ref:   (M*ks_pad, Cp)    f32   (one-hot class maps; padded rows/cols = 0)
    out_ref: (tb, Cp)          f32
    scratch: [(tb, M*ks_pad) f32 logits accumulator]  -- only when n_k > 1
    """

    def epilogue(logits):
        logsm = _group_log_softmax(logits, num_models, ks_pad)
        # Scatter-add over the class map as ONE one-hot matmul (exact gather):
        #   out[b, c] = sum_m logsm_m[b, class_maps[m, c]]
        out_ref[...] = jnp.dot(logsm, g_ref[...],
                               preferred_element_type=jnp.float32)

    if n_k == 1:
        # Fast path: whole D resident -> single MXU matmul, no accumulator RMW.
        epilogue(jnp.dot(x_ref[...], w_ref[...],
                         preferred_element_type=jnp.float32) + b_ref[...])
    else:
        acc_ref = scratch[0]
        k = pl.program_id(1)

        @pl.when(k == 0)
        def _():
            acc_ref[...] = jnp.zeros_like(acc_ref)

        acc_ref[...] += jnp.dot(x_ref[...], w_ref[...],
                                preferred_element_type=jnp.float32)

        @pl.when(k == pl.num_programs(1) - 1)
        def _():
            epilogue(acc_ref[...] + b_ref[...])


def prepare_params(weights, biases, class_maps):
    """Hoisted once per model: stack + lane-pad parameters, build one-hot maps.

    weights:    (M, D, K_sub) f32
    biases:     (M, K_sub)    f32
    class_maps: (M, num_class) int — class_maps[m, c] = sub-model-m output index
                                     that final class c maps to.
    Returns:
      w_stacked (D, M*ks_pad) f32, b_stacked (1, M*ks_pad) f32,
      g_stacked (M*ks_pad, Cp) f32, with ks_pad = roundup(K_sub, 128) and
      Cp = roundup(num_class, 128).  Padded logit lanes carry bias=-1e30 and
      zero weight columns; padded gather rows/columns are zero.
    """
    weights = np.asarray(weights, np.float32)
    biases = np.asarray(biases, np.float32)
    cm = np.asarray(class_maps)
    M, D, K_sub = weights.shape
    num_class = cm.shape[1]
    ks_pad = _round_up(K_sub, _LANE)
    c_pad = _round_up(num_class, _LANE)

    w_stacked = np.zeros((D, M * ks_pad), np.float32)
    b_stacked = np.full((1, M * ks_pad), _NEG_PAD, np.float32)
    g_stacked = np.zeros((M * ks_pad, c_pad), np.float32)
    for m in range(M):
        base = m * ks_pad
        w_stacked[:, base:base + K_sub] = weights[m]
        b_stacked[0, base:base + K_sub] = biases[m]
        for c in range(num_class):
            g_stacked[base + int(cm[m, c]), c] = 1.0

    return jnp.asarray(w_stacked), jnp.asarray(b_stacked), jnp.asarray(g_stacked)


def _vmem_bytes(tb, dk, mkp, cp, n_k):
    est = 2 * (tb * dk * 2)        # x tiles, bf16, double-buffered
    est += 2 * (dk * mkp * 2)      # stacked W tiles, bf16, double-buffered
    est += 2 * (mkp * 4)           # bias
    est += 2 * (mkp * cp * 4)      # one-hot gather matrix
    est += 2 * (tb * cp * 4)       # output tile
    if n_k > 1:
        est += tb * mkp * 4        # logits accumulator scratch
    return est


@functools.partial(jax.jit, static_argnames=("num_sub_models", "num_class",
                                             "dk", "w_buffers"))
def hierarchical_forward(x_nchw, w_stacked, b_stacked, g_stacked, *,
                         num_sub_models, num_class, dk=None, w_buffers=None):
    """x_nchw: (B, C, H, W) f32; stacked params from prepare_params()."""
    B = x_nchw.shape[0]
    D, MKp = w_stacked.shape
    Cp = g_stacked.shape[1]
    ks_pad = MKp // num_sub_models

    # ---- batch (sublane / MXU-row) fill: pad B, tile over a parallel axis ----
    if B >= 256:
        tb = 256
    elif B >= 128:
        tb = 128
    else:
        tb = _round_up(B, 16)          # bf16 packs 16 rows per vreg sublane set
    b_pad = _round_up(B, tb)

    x = x_nchw.reshape(B, D)
    if b_pad != B:
        x = jnp.pad(x, ((0, b_pad - B), (0, 0)))

    # bf16 MXU inputs (full-rate MXU on v6e/v7x, half the HBM bytes);
    # accumulation + softmax + gather matmul stay f32 (flagged numerics policy).
    x_mxu = x.astype(jnp.bfloat16)
    w_mxu = w_stacked.astype(jnp.bfloat16)
    b_f32 = b_stacked.astype(jnp.float32)
    g_f32 = g_stacked.astype(jnp.float32)

    # ---- D-reduction tiling against the VMEM budget (v7x: 64 MiB physical) ----
    budget = 40 * 1024 * 1024
    if dk is None:
        dk = D
        if _vmem_bytes(tb, D, MKp, Cp, 1) > budget:
            for cand in range((D // _LANE) * _LANE, _LANE - 1, -_LANE):
                if D % cand == 0 and _vmem_bytes(tb, cand, MKp, Cp,
                                                 D // cand) <= budget:
                    dk = cand
                    break
    assert D % dk == 0 and (dk == D or dk % _LANE == 0), \
        "dk must divide D and be a multiple of 128 when tiled"
    n_k = D // dk
    vmem_limit = int(min(max(_vmem_bytes(tb, dk, MKp, Cp, n_k) + (4 << 20),
                             32 << 20), 48 << 20))

    kernel = functools.partial(_hier_kernel, num_models=num_sub_models,
                               ks_pad=ks_pad, n_k=n_k)

    # Optional deeper pipelining of the dominant (dk, MKp) W stream when the
    # D-reduction is tiled (v6e; re-check the VMEM budget before enabling).
    w_spec_kwargs = {}
    if w_buffers is not None and n_k > 1 and w_buffers != 2:
        w_spec_kwargs["pipeline_mode"] = pl.Buffered(w_buffers)
    w_spec = pl.BlockSpec((dk, MKp), lambda b, k: (k, 0), **w_spec_kwargs)

    out_padded = pl.pallas_call(
        kernel,
        out_shape=jax.ShapeDtypeStruct((b_pad, Cp), jnp.float32),
        grid_spec=pltpu.PrefetchScalarGridSpec(
            num_scalar_prefetch=0,
            grid=(b_pad // tb, n_k),
            in_specs=[
                pl.BlockSpec((tb, dk), lambda b, k: (b, k)),       # x tile
                w_spec,                                            # stacked W
                pl.BlockSpec((1, MKp), lambda b, k: (0, 0)),       # biases
                pl.BlockSpec((MKp, Cp), lambda b, k: (0, 0)),      # one-hot maps
            ],
            out_specs=pl.BlockSpec((tb, Cp), lambda b, k: (b, 0)),
            scratch_shapes=([] if n_k == 1
                            else [pltpu.VMEM((tb, MKp), jnp.float32)]),
        ),
        compiler_params=pltpu.CompilerParams(
            dimension_semantics=("parallel", "arbitrary"),
            vmem_limit_bytes=vmem_limit,
        ),
    )(x_mxu, w_mxu, b_f32, g_f32)

    # Kernel stores are lane-dense (tb, 128); slice back to the real shape here.
    return out_padded[:B, :num_class]


def _reference(x_nchw, weights, biases, class_maps, num_class, *, mxu_bf16):
    """Pure-JAX mirror of the PyTorch forward.  mxu_bf16=True mirrors the
    kernel's dtype policy (bf16 matmul inputs, f32 accumulation/softmax);
    mxu_bf16=False is the original pure-f32 semantics."""
    B = x_nchw.shape[0]
    M, D, K_sub = weights.shape
    x = x_nchw.reshape(B, D)
    if mxu_bf16:
        x = x.astype(jnp.bfloat16)
    result = jnp.zeros((B, num_class), jnp.float32)
    for i in range(M):
        w = weights[i].astype(jnp.bfloat16) if mxu_bf16 else weights[i]
        logits = jnp.dot(x, w, preferred_element_type=jnp.float32) + biases[i]
        logsm = jax.nn.log_softmax(logits, axis=1)
        c = class_maps[i]
        for j in range(K_sub):
            mask = (c == j).astype(jnp.float32)[None, :]       # (1, num_class)
            result = result + mask * logsm[:, j][:, None]      # broadcast add
    return result


if __name__ == "__main__":
    # Small shapes consistent with the module: batch=2, channels=4, spatial=16.
    B, C, H, W = 2, 4, 16, 16
    D = C * H * W
    M = 3            # number of sub-models
    K_sub = 4        # each sub-model outputs 4 coarse classes
    NUM_CLASS = 8    # final number of classes (len(classes[0]))

    key = jax.random.PRNGKey(0)
    kx, kw, kb, kc = jax.random.split(key, 4)

    x = jax.random.normal(kx, (B, C, H, W), dtype=jnp.float32)
    # TODO(synk): the original module's sub-models are unspecified nn.Modules;
    # they are realized here as linear classifiers on the flattened input.
    weights = jax.random.normal(kw, (M, D, K_sub), dtype=jnp.float32) * 0.02
    biases = jax.random.normal(kb, (M, K_sub), dtype=jnp.float32) * 0.1
    # classes[i]: for each final class k, which output j of sub-model i it maps to
    class_maps = jax.random.randint(kc, (M, NUM_CLASS), 0, K_sub, dtype=jnp.int32)

    # Hoisted once per model (static): stacked, lane-padded params + gather map.
    w_stacked, b_stacked, g_stacked = prepare_params(weights, biases, class_maps)

    out = hierarchical_forward(x, w_stacked, b_stacked, g_stacked,
                               num_sub_models=M, num_class=NUM_CLASS)
    out = jax.block_until_ready(out)

    # Tight check vs. the kernel's (intentional, flagged) bf16-MXU numerics
    # policy; loose check vs. the original pure-f32 PyTorch semantics.
    ref_policy = _reference(x, weights, biases, class_maps, NUM_CLASS,
                            mxu_bf16=True)
    np.testing.assert_allclose(np.asarray(out), np.asarray(ref_policy),
                               rtol=1e-4, atol=1e-4)
    ref_f32 = _reference(x, weights, biases, class_maps, NUM_CLASS,
                         mxu_bf16=False)
    np.testing.assert_allclose(np.asarray(out), np.asarray(ref_f32),
                               rtol=1e-1, atol=1e-1)

    print("KERNEL_OK")
</pallas_src>

<mosaic_0001>
module attributes {stable_mosaic.version = 11 : i64} {
  func.func @_hier_kernel(%arg0: i32, %arg1: i32, %arg2: memref<16x1024xbf16, #tpu.memory_space<vmem>>, %arg3: memref<1024x384xbf16, #tpu.memory_space<vmem>>, %arg4: memref<1x384xf32, #tpu.memory_space<vmem>>, %arg5: memref<384x128xf32, #tpu.memory_space<vmem>>, %arg6: memref<16x128xf32, #tpu.memory_space<vmem>>) attributes {dimension_semantics = [#tpu.dimension_semantics<parallel>, #tpu.dimension_semantics<arbitrary>], iteration_bounds = array<i64: 1, 1>, scalar_prefetch = 0 : i64, scratch_operands = 0 : i64, tpu.core_type = #tpu.core_type<tc>, window_params = [{transform_indices = @transform_0, window_bounds = array<i64: 16, 1024>}, {transform_indices = @transform_1, window_bounds = array<i64: 1024, 384>}, {pipeline_mode = #tpu.pipeline_mode<synchronous>, transform_indices = @transform_2, window_bounds = array<i64: 1, 384>}, {pipeline_mode = #tpu.pipeline_mode<synchronous>, transform_indices = @transform_3, window_bounds = array<i64: 384, 128>}, {transform_indices = @transform_4, window_bounds = array<i64: 16, 128>}]} {
    %c0 = arith.constant 0 : index
    %c0_0 = arith.constant 0 : index
    %0 = vector.load %arg2[%c0, %c0_0] : memref<16x1024xbf16, #tpu.memory_space<vmem>>, vector<16x1024xbf16>
    %c0_1 = arith.constant 0 : index
    %c0_2 = arith.constant 0 : index
    %1 = vector.load %arg3[%c0_1, %c0_2] : memref<1024x384xbf16, #tpu.memory_space<vmem>>, vector<1024x384xbf16>
    %cst = arith.constant dense<0.000000e+00> : vector<16x384xf32>
    %2 = tpu.matmul %0, %1, %cst {dimension_numbers = #tpu.dot_dimension_numbers<[1], [0], [0], [1], [0, 0, 1, 1], [], []>} : vector<16x1024xbf16>, vector<1024x384xbf16>, vector<16x384xf32> -> vector<16x384xf32>
    %c0_3 = arith.constant 0 : index
    %c0_4 = arith.constant 0 : index
    %3 = vector.load %arg4[%c0_3, %c0_4] : memref<1x384xf32, #tpu.memory_space<vmem>>, vector<1x384xf32>
    %4 = vector.broadcast %3 : vector<1x384xf32> to vector<16x384xf32>
    %5 = arith.addf %2, %4 : vector<16x384xf32>
    %6 = vector.extract_strided_slice %5 {offsets = [0, 0], sizes = [16, 128], strides = [1, 1]} : vector<16x384xf32> to vector<16x128xf32>
    %cst_5 = arith.constant dense<0xFF800000> : vector<16xf32>
    %7 = vector.multi_reduction <maximumf>, %6, %cst_5 [1] : vector<16x128xf32> to vector<16xf32>
    %8 = vector.shape_cast %7 : vector<16xf32> to vector<16x1xf32>
    %9 = vector.broadcast %8 : vector<16x1xf32> to vector<16x128xf32>
    %10 = arith.subf %6, %9 : vector<16x128xf32>
    %11 = math.exp %10 : vector<16x128xf32>
    %cst_6 = arith.constant dense<0.000000e+00> : vector<16xf32>
    %12 = vector.multi_reduction <add>, %11, %cst_6 [1] : vector<16x128xf32> to vector<16xf32>
    %13 = vector.shape_cast %12 : vector<16xf32> to vector<16x1xf32>
    %14 = math.log %13 : vector<16x1xf32>
    %15 = vector.broadcast %14 : vector<16x1xf32> to vector<16x128xf32>
    %16 = arith.subf %10, %15 : vector<16x128xf32>
    %17 = vector.extract_strided_slice %5 {offsets = [0, 128], sizes = [16, 128], strides = [1, 1]} : vector<16x384xf32> to vector<16x128xf32>
    %cst_7 = arith.constant dense<0xFF800000> : vector<16xf32>
    %18 = vector.multi_reduction <maximumf>, %17, %cst_7 [1] : vector<16x128xf32> to vector<16xf32>
    %19 = vector.shape_cast %18 : vector<16xf32> to vector<16x1xf32>
    %20 = vector.broadcast %19 : vector<16x1xf32> to vector<16x128xf32>
    %21 = arith.subf %17, %20 : vector<16x128xf32>
    %22 = math.exp %21 : vector<16x128xf32>
    %cst_8 = arith.constant dense<0.000000e+00> : vector<16xf32>
    %23 = vector.multi_reduction <add>, %22, %cst_8 [1] : vector<16x128xf32> to vector<16xf32>
    %24 = vector.shape_cast %23 : vector<16xf32> to vector<16x1xf32>
    %25 = math.log %24 : vector<16x1xf32>
    %26 = vector.broadcast %25 : vector<16x1xf32> to vector<16x128xf32>
    %27 = arith.subf %21, %26 : vector<16x128xf32>
    %28 = vector.extract_strided_slice %5 {offsets = [0, 256], sizes = [16, 128], strides = [1, 1]} : vector<16x384xf32> to vector<16x128xf32>
    %cst_9 = arith.constant dense<0xFF800000> : vector<16xf32>
    %29 = vector.multi_reduction <maximumf>, %28, %cst_9 [1] : vector<16x128xf32> to vector<16xf32>
    %30 = vector.shape_cast %29 : vector<16xf32> to vector<16x1xf32>
    %31 = vector.broadcast %30 : vector<16x1xf32> to vector<16x128xf32>
    %32 = arith.subf %28, %31 : vector<16x128xf32>
    %33 = math.exp %32 : vector<16x128xf32>
    %cst_10 = arith.constant dense<0.000000e+00> : vector<16xf32>
    %34 = vector.multi_reduction <add>, %33, %cst_10 [1] : vector<16x128xf32> to vector<16xf32>
    %35 = vector.shape_cast %34 : vector<16xf32> to vector<16x1xf32>
    %36 = math.log %35 : vector<16x1xf32>
    %37 = vector.broadcast %36 : vector<16x1xf32> to vector<16x128xf32>
    %38 = arith.subf %32, %37 : vector<16x128xf32>
    %39 = tpu.concatenate %16, %27, %38 in 1 : vector<16x128xf32>, vector<16x128xf32>, vector<16x128xf32> -> vector<16x384xf32>
    %c0_11 = arith.constant 0 : index
    %c0_12 = arith.constant 0 : index
    %40 = vector.load %arg5[%c0_11, %c0_12] : memref<384x128xf32, #tpu.memory_space<vmem>>, vector<384x128xf32>
    %cst_13 = arith.constant dense<0.000000e+00> : vector<16x128xf32>
    %41 = tpu.matmul %39, %40, %cst_13 {dimension_numbers = #tpu.dot_dimension_numbers<[1], [0], [0], [1], [0, 0, 1, 1], [], []>} : vector<16x384xf32>, vector<384x128xf32>, vector<16x128xf32> -> vector<16x128xf32>
    %c0_14 = arith.constant 0 : index
    %c0_15 = arith.constant 0 : index
    %42 = vector.load %arg6[%c0_14, %c0_15] : memref<16x128xf32, #tpu.memory_space<vmem>>, vector<16x128xf32>
    tpu.vector_store %arg6[%c0_14, %c0_15], %41 {strides = array<i32>} : memref<16x128xf32, #tpu.memory_space<vmem>>, vector<16x128xf32>,
    return
  }
  func.func @transform_0(%arg0: i32, %arg1: i32) -> (i32, i32) {
    %c0_i32 = arith.constant 0 : i32
    return %arg0, %arg1 : i32, i32
  }
  func.func @transform_1(%arg0: i32, %arg1: i32) -> (i32, i32) {
    %c0_i32 = arith.constant 0 : i32
    %c0_i32_0 = arith.constant 0 : i32
    return %arg1, %c0_i32 : i32, i32
  }
  func.func @transform_2(%arg0: i32, %arg1: i32) -> (i32, i32) {
    %c0_i32 = arith.constant 0 : i32
    %c0_i32_0 = arith.constant 0 : i32
    %c0_i32_1 = arith.constant 0 : i32
    return %c0_i32, %c0_i32_0 : i32, i32
  }
  func.func @transform_3(%arg0: i32, %arg1: i32) -> (i32, i32) {
    %c0_i32 = arith.constant 0 : i32
    %c0_i32_0 = arith.constant 0 : i32
    %c0_i32_1 = arith.constant 0 : i32
    return %c0_i32, %c0_i32_0 : i32, i32
  }
  func.func @transform_4(%arg0: i32, %arg1: i32) -> (i32, i32) {
    %c0_i32 = arith.constant 0 : i32
    %c0_i32_0 = arith.constant 0 : i32
    return %arg0, %c0_i32 : i32, i32
  }
}

</mosaic_0001>

<llo_original>
// kernel: hierarchical_forward.1
$region0: #{hierarchical_forward.1}
  #allocation0 [shape = 'u32[]', space=smem, size = 0x4, offset = 0x4, fixed_abs, tag = 'smem constant byte address 0x4 - core index']
  #allocation1 [shape = 'u32[72,128]{1,0:T(1,128)}', space=vmem, size = 0x9000, scoped, tag = 'internal scratch']
  %s0 = inlined_call_operand.vmem [shape: bf16[16,1024], index: 0, kind: input, shape index: {}]
  %s1 = inlined_call_operand.vmem [shape: bf16[1024,384], index: 1, kind: input, shape index: {}]
  %s2 = inlined_call_operand.vmem [shape: f32[1,384], index: 2, kind: input, shape index: {}]
  %s3 = inlined_call_operand.vmem [shape: f32[384,128], index: 3, kind: input, shape index: {}]
  %s4 = inlined_call_operand.vmem [shape: f32[16,128], index: 4, kind: output, shape index: {}]
  %s5 = sld [smem:[#allocation0]]
  $region26: #{hierarchical_forward.1} parent=0
    _
  %s7 = ssub.s32 1, %s5
  %s8 = scalar_select 0, %s7, %s5
  // Predicated region
  $region2: #{hierarchical_forward.1} parent=0 // pred_check
    _
  $region3: #{hierarchical_forward.1} parent=0 // pred_check_branch
    %10 = sbr.rel (0) target = $region5
  $region4: #{hierarchical_forward.1} parent=0 // pred_region
    _
  $region5: #{hierarchical_forward.1} parent=0 // pred_fallthru
    _
  // Predicated region
  $region6: #{hierarchical_forward.1} parent=0 // pred_check
    _
  $region7: #{hierarchical_forward.1} parent=0 // pred_check_branch
    %12 = sbr.rel (0) target = $region9
  $region8: #{hierarchical_forward.1} parent=0 // pred_region
    _
  $region9: #{hierarchical_forward.1} parent=0 // pred_fallthru
    _
  // Predicated region
  $region10: #{hierarchical_forward.1} parent=0 // pred_check
    _
  $region11: #{hierarchical_forward.1} parent=0 // pred_check_branch
    %14 = sbr.rel (0) target = $region13
  $region12: #{hierarchical_forward.1} parent=0 // pred_region
    _
  $region13: #{hierarchical_forward.1} parent=0 // pred_fallthru
    _
  // Predicated region
  $region14: #{hierarchical_forward.1} parent=0 // pred_check
    _
  $region15: #{hierarchical_forward.1} parent=0 // pred_check_branch
    %16 = sbr.rel (0) target = $region17
  $region16: #{hierarchical_forward.1} parent=0 // pred_region
    _
  $region17: #{hierarchical_forward.1} parent=0 // pred_fallthru
    _
  %v17 = vld [vmem:[%s0] sm:$0xff]
  %v18 = vld [vmem:[%s0 + $0x8] sm:$0xff]
  %v19 = vld [vmem:[%s0 + $0x10] sm:$0xff]
  %v20 = vld [vmem:[%s0 + $0x18] sm:$0xff]
  %v21 = vld [vmem:[%s0 + $0x20] sm:$0xff]
  %v22 = vld [vmem:[%s0 + $0x28] sm:$0xff]
  %v23 = vld [vmem:[%s0 + $0x30] sm:$0xff]
  %v24 = vld [vmem:[%s0 + $0x38] sm:$0xff]
  %v25 = vld [vmem:[%s1] sm:$0xff]
  %v26 = vld [vmem:[%s1 + $0x8] sm:$0xf]
  %v27 = vld [vmem:[%s1 + $0xc] sm:$0xff]
  %v28 = vld [vmem:[%s1 + $0x14] sm:$0xf]
  %v29 = vld [vmem:[%s1 + $0x18] sm:$0xff]
  %v30 = vld [vmem:[%s1 + $0x20] sm:$0xf]
  %v31 = vld [vmem:[%s1 + $0x24] sm:$0xff]
  %v32 = vld [vmem:[%s1 + $0x2c] sm:$0xf]
  %v33 = vld [vmem:[%s1 + $0x30] sm:$0xff]
  %v34 = vld [vmem:[%s1 + $0x38] sm:$0xf]
  %v35 = vld [vmem:[%s1 + $0x3c] sm:$0xff]
  %v36 = vld [vmem:[%s1 + $0x44] sm:$0xf]
  %v37 = vld [vmem:[%s1 + $0x48] sm:$0xff]
  %v38 = vld [vmem:[%s1 + $0x50] sm:$0xf]
  %v39 = vld [vmem:[%s1 + $0x54] sm:$0xff]
  %v40 = vld [vmem:[%s1 + $0x5c] sm:$0xf]
  %v41 = vld [vmem:[%s1 + $0x60] sm:$0xff]
  %v42 = vld [vmem:[%s1 + $0x68] sm:$0xf]
  %v43 = vld [vmem:[%s1 + $0x6c] sm:$0xff]
  %v44 = vld [vmem:[%s1 + $0x74] sm:$0xf]
  %v45 = vld [vmem:[%s1 + $0x78] sm:$0xff]
  %v46 = vld [vmem:[%s1 + $0x80] sm:$0xf]
  %v47 = vld [vmem:[%s1 + $0x84] sm:$0xff]
  %v48 = vld [vmem:[%s1 + $0x8c] sm:$0xf]
  %v49 = vld [vmem:[%s1 + $0x90] sm:$0xff]
  %v50 = vld [vmem:[%s1 + $0x98] sm:$0xf]
  %v51 = vld [vmem:[%s1 + $0x9c] sm:$0xff]
  %v52 = vld [vmem:[%s1 + $0xa4] sm:$0xf]
  %v53 = vld [vmem:[%s1 + $0xa8] sm:$0xff]
  %v54 = vld [vmem:[%s1 + $0xb0] sm:$0xf]
  %v55 = vld [vmem:[%s1 + $0xb4] sm:$0xff]
  %v56 = vld [vmem:[%s1 + $0xbc] sm:$0xf]
  %v57 = vld [vmem:[%s1 + $0xc0] sm:$0xff]
  %v58 = vld [vmem:[%s1 + $0xc8] sm:$0xf]
  %v59 = vld [vmem:[%s1 + $0xcc] sm:$0xff]
  %v60 = vld [vmem:[%s1 + $0xd4] sm:$0xf]
  %v61 = vld [vmem:[%s1 + $0xd8] sm:$0xff]
  %v62 = vld [vmem:[%s1 + $0xe0] sm:$0xf]
  %v63 = vld [vmem:[%s1 + $0xe4] sm:$0xff]
  %v64 = vld [vmem:[%s1 + $0xec] sm:$0xf]
  %v65 = vld [vmem:[%s1 + $0xf0] sm:$0xff]
  %v66 = vld [vmem:[%s1 + $0xf8] sm:$0xf]
  %v67 = vld [vmem:[%s1 + $0xfc] sm:$0xff]
  %v68 = vld [vmem:[%s1 + $0x104] sm:$0xf]
  %v69 = vld [vmem:[%s1 + $0x108] sm:$0xff]
  %v70 = vld [vmem:[%s1 + $0x110] sm:$0xf]
  %v71 = vld [vmem:[%s1 + $0x114] sm:$0xff]
  %v72 = vld [vmem:[%s1 + $0x11c] sm:$0xf]
  %v73 = vld [vmem:[%s1 + $0x120] sm:$0xff]
  %v74 = vld [vmem:[%s1 + $0x128] sm:$0xf]
  %v75 = vld [vmem:[%s1 + $0x12c] sm:$0xff]
  %v76 = vld [vmem:[%s1 + $0x134] sm:$0xf]
  %v77 = vld [vmem:[%s1 + $0x138] sm:$0xff]
  %v78 = vld [vmem:[%s1 + $0x140] sm:$0xf]
  %v79 = vld [vmem:[%s1 + $0x144] sm:$0xff]
  %v80 = vld [vmem:[%s1 + $0x14c] sm:$0xf]
  %v81 = vld [vmem:[%s1 + $0x150] sm:$0xff]
  %v82 = vld [vmem:[%s1 + $0x158] sm:$0xf]
  %v83 = vld [vmem:[%s1 + $0x15c] sm:$0xff]
  %v84 = vld [vmem:[%s1 + $0x164] sm:$0xf]
  %v85 = vld [vmem:[%s1 + $0x168] sm:$0xff]
  %v86 = vld [vmem:[%s1 + $0x170] sm:$0xf]
  %v87 = vld [vmem:[%s1 + $0x174] sm:$0xff]
  %v88 = vld [vmem:[%s1 + $0x17c] sm:$0xf]
  %v89 = vld [vmem:[%s1 + $0x180] sm:$0xff]
  %v90 = vld [vmem:[%s1 + $0x188] sm:$0xf]
  %v91 = vld [vmem:[%s1 + $0x18c] sm:$0xff]
  %v92 = vld [vmem:[%s1 + $0x194] sm:$0xf]
  %v93 = vld [vmem:[%s1 + $0x198] sm:$0xff]
  %v94 = vld [vmem:[%s1 + $0x1a0] sm:$0xf]
  %v95 = vld [vmem:[%s1 + $0x1a4] sm:$0xff]
  %v96 = vld [vmem:[%s1 + $0x1ac] sm:$0xf]
  %v97 = vld [vmem:[%s1 + $0x1b0] sm:$0xff]
  %v98 = vld [vmem:[%s1 + $0x1b8] sm:$0xf]
  %v99 = vld [vmem:[%s1 + $0x1bc] sm:$0xff]
  %v100 = vld [vmem:[%s1 + $0x1c4] sm:$0xf]
  %v101 = vld [vmem:[%s1 + $0x1c8] sm:$0xff]
  %v102 = vld [vmem:[%s1 + $0x1d0] sm:$0xf]
  %v103 = vld [vmem:[%s1 + $0x1d4] sm:$0xff]
  %v104 = vld [vmem:[%s1 + $0x1dc] sm:$0xf]
  %v105 = vld [vmem:[%s1 + $0x1e0] sm:$0xff]
  %v106 = vld [vmem:[%s1 + $0x1e8] sm:$0xf]
  %v107 = vld [vmem:[%s1 + $0x1ec] sm:$0xff]
  %v108 = vld [vmem:[%s1 + $0x1f4] sm:$0xf]
  %v109 = vld [vmem:[%s1 + $0x1f8] sm:$0xff]
  %v110 = vld [vmem:[%s1 + $0x200] sm:$0xf]
  %v111 = vld [vmem:[%s1 + $0x204] sm:$0xff]
  %v112 = vld [vmem:[%s1 + $0x20c] sm:$0xf]
  %v113 = vld [vmem:[%s1 + $0x210] sm:$0xff]
  %v114 = vld [vmem:[%s1 + $0x218] sm:$0xf]
  %v115 = vld [vmem:[%s1 + $0x21c] sm:$0xff]
  %v116 = vld [vmem:[%s1 + $0x224] sm:$0xf]
  %v117 = vld [vmem:[%s1 + $0x228] sm:$0xff]
  %v118 = vld [vmem:[%s1 + $0x230] sm:$0xf]
  %v119 = vld [vmem:[%s1 + $0x234] sm:$0xff]
  %v120 = vld [vmem:[%s1 + $0x23c] sm:$0xf]
  %v121 = vld [vmem:[%s1 + $0x240] sm:$0xff]
  %v122 = vld [vmem:[%s1 + $0x248] sm:$0xf]
  %v123 = vld [vmem:[%s1 + $0x24c] sm:$0xff]
  %v124 = vld [vmem:[%s1 + $0x254] sm:$0xf]
  %v125 = vld [vmem:[%s1 + $0x258] sm:$0xff]
  %v126 = vld [vmem:[%s1 + $0x260] sm:$0xf]
  %v127 = vld [vmem:[%s1 + $0x264] sm:$0xff]
  %v128 = vld [vmem:[%s1 + $0x26c] sm:$0xf]
  %v129 = vld [vmem:[%s1 + $0x270] sm:$0xff]
  %v130 = vld [vmem:[%s1 + $0x278] sm:$0xf]
  %v131 = vld [vmem:[%s1 + $0x27c] sm:$0xff]
  %v132 = vld [vmem:[%s1 + $0x284] sm:$0xf]
  %v133 = vld [vmem:[%s1 + $0x288] sm:$0xff]
  %v134 = vld [vmem:[%s1 + $0x290] sm:$0xf]
  %v135 = vld [vmem:[%s1 + $0x294] sm:$0xff]
  %v136 = vld [vmem:[%s1 + $0x29c] sm:$0xf]
  %v137 = vld [vmem:[%s1 + $0x2a0] sm:$0xff]
  %v138 = vld [vmem:[%s1 + $0x2a8] sm:$0xf]
  %v139 = vld [vmem:[%s1 + $0x2ac] sm:$0xff]
  %v140 = vld [vmem:[%s1 + $0x2b4] sm:$0xf]
  %v141 = vld [vmem:[%s1 + $0x2b8] sm:$0xff]
  %v142 = vld [vmem:[%s1 + $0x2c0] sm:$0xf]
  %v143 = vld [vmem:[%s1 + $0x2c4] sm:$0xff]
  %v144 = vld [vmem:[%s1 + $0x2cc] sm:$0xf]
  %v145 = vld [vmem:[%s1 + $0x2d0] sm:$0xff]
  %v146 = vld [vmem:[%s1 + $0x2d8] sm:$0xf]
  %v147 = vld [vmem:[%s1 + $0x2dc] sm:$0xff]
  %v148 = vld [vmem:[%s1 + $0x2e4] sm:$0xf]
  %v149 = vld [vmem:[%s1 + $0x2e8] sm:$0xff]
  %v150 = vld [vmem:[%s1 + $0x2f0] sm:$0xf]
  %v151 = vld [vmem:[%s1 + $0x2f4] sm:$0xff]
  %v152 = vld [vmem:[%s1 + $0x2fc] sm:$0xf]
  %v153 = vld [vmem:[%s1 + $0x300] sm:$0xff]
  %v154 = vld [vmem:[%s1 + $0x308] sm:$0xf]
  %v155 = vld [vmem:[%s1 + $0x30c] sm:$0xff]
  %v156 = vld [vmem:[%s1 + $0x314] sm:$0xf]
  %v157 = vld [vmem:[%s1 + $0x318] sm:$0xff]
  %v158 = vld [vmem:[%s1 + $0x320] sm:$0xf]
  %v159 = vld [vmem:[%s1 + $0x324] sm:$0xff]
  %v160 = vld [vmem:[%s1 + $0x32c] sm:$0xf]
  %v161 = vld [vmem:[%s1 + $0x330] sm:$0xff]
  %v162 = vld [vmem:[%s1 + $0x338] sm:$0xf]
  %v163 = vld [vmem:[%s1 + $0x33c] sm:$0xff]
  %v164 = vld [vmem:[%s1 + $0x344] sm:$0xf]
  %v165 = vld [vmem:[%s1 + $0x348] sm:$0xff]
  %v166 = vld [vmem:[%s1 + $0x350] sm:$0xf]
  %v167 = vld [vmem:[%s1 + $0x354] sm:$0xff]
  %v168 = vld [vmem:[%s1 + $0x35c] sm:$0xf]
  %v169 = vld [vmem:[%s1 + $0x360] sm:$0xff]
  %v170 = vld [vmem:[%s1 + $0x368] sm:$0xf]
  %v171 = vld [vmem:[%s1 + $0x36c] sm:$0xff]
  %v172 = vld [vmem:[%s1 + $0x374] sm:$0xf]
  %v173 = vld [vmem:[%s1 + $0x378] sm:$0xff]
  %v174 = vld [vmem:[%s1 + $0x380] sm:$0xf]
  %v175 = vld [vmem:[%s1 + $0x384] sm:$0xff]
  %v176 = vld [vmem:[%s1 + $0x38c] sm:$0xf]
  %v177 = vld [vmem:[%s1 + $0x390] sm:$0xff]
  %v178 = vld [vmem:[%s1 + $0x398] sm:$0xf]
  %v179 = vld [vmem:[%s1 + $0x39c] sm:$0xff]
  %v180 = vld [vmem:[%s1 + $0x3a4] sm:$0xf]
  %v181 = vld [vmem:[%s1 + $0x3a8] sm:$0xff]
  %v182 = vld [vmem:[%s1 + $0x3b0] sm:$0xf]
  %v183 = vld [vmem:[%s1 + $0x3b4] sm:$0xff]
  %v184 = vld [vmem:[%s1 + $0x3bc] sm:$0xf]
  %v185 = vld [vmem:[%s1 + $0x3c0] sm:$0xff]
  %v186 = vld [vmem:[%s1 + $0x3c8] sm:$0xf]
  %v187 = vld [vmem:[%s1 + $0x3cc] sm:$0xff]
  %v188 = vld [vmem:[%s1 + $0x3d4] sm:$0xf]
  %v189 = vld [vmem:[%s1 + $0x3d8] sm:$0xff]
  %v190 = vld [vmem:[%s1 + $0x3e0] sm:$0xf]
  %v191 = vld [vmem:[%s1 + $0x3e4] sm:$0xff]
  %v192 = vld [vmem:[%s1 + $0x3ec] sm:$0xf]
  %v193 = vld [vmem:[%s1 + $0x3f0] sm:$0xff]
  %v194 = vld [vmem:[%s1 + $0x3f8] sm:$0xf]
  %v195 = vld [vmem:[%s1 + $0x3fc] sm:$0xff]
  %v196 = vld [vmem:[%s1 + $0x404] sm:$0xf]
  %v197 = vld [vmem:[%s1 + $0x408] sm:$0xff]
  %v198 = vld [vmem:[%s1 + $0x410] sm:$0xf]
  %v199 = vld [vmem:[%s1 + $0x414] sm:$0xff]
  %v200 = vld [vmem:[%s1 + $0x41c] sm:$0xf]
  %v201 = vld [vmem:[%s1 + $0x420] sm:$0xff]
  %v202 = vld [vmem:[%s1 + $0x428] sm:$0xf]
  %v203 = vld [vmem:[%s1 + $0x42c] sm:$0xff]
  %v204 = vld [vmem:[%s1 + $0x434] sm:$0xf]
  %v205 = vld [vmem:[%s1 + $0x438] sm:$0xff]
  %v206 = vld [vmem:[%s1 + $0x440] sm:$0xf]
  %v207 = vld [vmem:[%s1 + $0x444] sm:$0xff]
  %v208 = vld [vmem:[%s1 + $0x44c] sm:$0xf]
  %v209 = vld [vmem:[%s1 + $0x450] sm:$0xff]
  %v210 = vld [vmem:[%s1 + $0x458] sm:$0xf]
  %v211 = vld [vmem:[%s1 + $0x45c] sm:$0xff]
  %v212 = vld [vmem:[%s1 + $0x464] sm:$0xf]
  %v213 = vld [vmem:[%s1 + $0x468] sm:$0xff]
  %v214 = vld [vmem:[%s1 + $0x470] sm:$0xf]
  %v215 = vld [vmem:[%s1 + $0x474] sm:$0xff]
  %v216 = vld [vmem:[%s1 + $0x47c] sm:$0xf]
  %v217 = vld [vmem:[%s1 + $0x480] sm:$0xff]
  %v218 = vld [vmem:[%s1 + $0x488] sm:$0xf]
  %v219 = vld [vmem:[%s1 + $0x48c] sm:$0xff]
  %v220 = vld [vmem:[%s1 + $0x494] sm:$0xf]
  %v221 = vld [vmem:[%s1 + $0x498] sm:$0xff]
  %v222 = vld [vmem:[%s1 + $0x4a0] sm:$0xf]
  %v223 = vld [vmem:[%s1 + $0x4a4] sm:$0xff]
  %v224 = vld [vmem:[%s1 + $0x4ac] sm:$0xf]
  %v225 = vld [vmem:[%s1 + $0x4b0] sm:$0xff]
  %v226 = vld [vmem:[%s1 + $0x4b8] sm:$0xf]
  %v227 = vld [vmem:[%s1 + $0x4bc] sm:$0xff]
  %v228 = vld [vmem:[%s1 + $0x4c4] sm:$0xf]
  %v229 = vld [vmem:[%s1 + $0x4c8] sm:$0xff]
  %v230 = vld [vmem:[%s1 + $0x4d0] sm:$0xf]
  %v231 = vld [vmem:[%s1 + $0x4d4] sm:$0xff]
  %v232 = vld [vmem:[%s1 + $0x4dc] sm:$0xf]
  %v233 = vld [vmem:[%s1 + $0x4e0] sm:$0xff]
  %v234 = vld [vmem:[%s1 + $0x4e8] sm:$0xf]
  %v235 = vld [vmem:[%s1 + $0x4ec] sm:$0xff]
  %v236 = vld [vmem:[%s1 + $0x4f4] sm:$0xf]
  %v237 = vld [vmem:[%s1 + $0x4f8] sm:$0xff]
  %v238 = vld [vmem:[%s1 + $0x500] sm:$0xf]
  %v239 = vld [vmem:[%s1 + $0x504] sm:$0xff]
  %v240 = vld [vmem:[%s1 + $0x50c] sm:$0xf]
  %v241 = vld [vmem:[%s1 + $0x510] sm:$0xff]
  %v242 = vld [vmem:[%s1 + $0x518] sm:$0xf]
  %v243 = vld [vmem:[%s1 + $0x51c] sm:$0xff]
  %v244 = vld [vmem:[%s1 + $0x524] sm:$0xf]
  %v245 = vld [vmem:[%s1 + $0x528] sm:$0xff]
  %v246 = vld [vmem:[%s1 + $0x530] sm:$0xf]
  %v247 = vld [vmem:[%s1 + $0x534] sm:$0xff]
  %v248 = vld [vmem:[%s1 + $0x53c] sm:$0xf]
  %v249 = vld [vmem:[%s1 + $0x540] sm:$0xff]
  %v250 = vld [vmem:[%s1 + $0x548] sm:$0xf]
  %v251 = vld [vmem:[%s1 + $0x54c] sm:$0xff]
  %v252 = vld [vmem:[%s1 + $0x554] sm:$0xf]
  %v253 = vld [vmem:[%s1 + $0x558] sm:$0xff]
  %v254 = vld [vmem:[%s1 + $0x560] sm:$0xf]
  %v255 = vld [vmem:[%s1 + $0x564] sm:$0xff]
  %v256 = vld [vmem:[%s1 + $0x56c] sm:$0xf]
  %v257 = vld [vmem:[%s1 + $0x570] sm:$0xff]
  %v258 = vld [vmem:[%s1 + $0x578] sm:$0xf]
  %v259 = vld [vmem:[%s1 + $0x57c] sm:$0xff]
  %v260 = vld [vmem:[%s1 + $0x584] sm:$0xf]
  %v261 = vld [vmem:[%s1 + $0x588] sm:$0xff]
  %v262 = vld [vmem:[%s1 + $0x590] sm:$0xf]
  %v263 = vld [vmem:[%s1 + $0x594] sm:$0xff]
  %v264 = vld [vmem:[%s1 + $0x59c] sm:$0xf]
  %v265 = vld [vmem:[%s1 + $0x5a0] sm:$0xff]
  %v266 = vld [vmem:[%s1 + $0x5a8] sm:$0xf]
  %v267 = vld [vmem:[%s1 + $0x5ac] sm:$0xff]
  %v268 = vld [vmem:[%s1 + $0x5b4] sm:$0xf]
  %v269 = vld [vmem:[%s1 + $0x5b8] sm:$0xff]
  %v270 = vld [vmem:[%s1 + $0x5c0] sm:$0xf]
  %v271 = vld [vmem:[%s1 + $0x5c4] sm:$0xff]
  %v272 = vld [vmem:[%s1 + $0x5cc] sm:$0xf]
  %v273 = vld [vmem:[%s1 + $0x5d0] sm:$0xff]
  %v274 = vld [vmem:[%s1 + $0x5d8] sm:$0xf]
  %v275 = vld [vmem:[%s1 + $0x5dc] sm:$0xff]
  %v276 = vld [vmem:[%s1 + $0x5e4] sm:$0xf]
  %v277 = vld [vmem:[%s1 + $0x5e8] sm:$0xff]
  %v278 = vld [vmem:[%s1 + $0x5f0] sm:$0xf]
  %v279 = vld [vmem:[%s1 + $0x5f4] sm:$0xff]
  %v280 = vld [vmem:[%s1 + $0x5fc] sm:$0xf]
  %v281 = vld [vmem:[%s2] sm:$0x7]
  %v283 = vperm.slane %v281, 0
  %v284 = vperm.slane %v281, 1
  %v285 = vperm.slane %v281, 2
  %v297 = vunpack.c.l.b16 %v17
  %v298 = vunpack.c.h.b16 %v17
  %v299 = vunpack.c.l.b16 %v18
  %v300 = vunpack.c.h.b16 %v18
  %v301 = vunpack.c.l.b16 %v19
  %v302 = vunpack.c.h.b16 %v19
  %v303 = vunpack.c.l.b16 %v20
  %v304 = vunpack.c.h.b16 %v20
  %v305 = vunpack.c.l.b16 %v21
  %v306 = vunpack.c.h.b16 %v21
  %v307 = vunpack.c.l.b16 %v22
  %v308 = vunpack.c.h.b16 %v22
  %v309 = vunpack.c.l.b16 %v23
  %v310 = vunpack.c.h.b16 %v23
  %v311 = vunpack.c.l.b16 %v24
  %v312 = vunpack.c.h.b16 %v24
  %v313 = vpack.c.b16 %v305, %v297
  %v314 = vpack.c.b16 %v306, %v298
  %v315 = vpack.c.b16 %v307, %v299
  %v316 = vpack.c.b16 %v308, %v300
  %v317 = vpack.c.b16 %v309, %v301
  %v318 = vpack.c.b16 %v310, %v302
  %v319 = vpack.c.b16 %v311, %v303
  %v320 = vpack.c.b16 %v312, %v304
  %v585 = vunpack.c.l.b16 %v25
  %v586 = vunpack.c.h.b16 %v25
  %v587 = vunpack.c.l.b16 %v26
  %v588 = vunpack.c.l.b16 %v27
  %v589 = vunpack.c.h.b16 %v27
  %v590 = vunpack.c.l.b16 %v28
  %v591 = vunpack.c.l.b16 %v29
  %v592 = vunpack.c.h.b16 %v29
  %v593 = vunpack.c.l.b16 %v30
  %v594 = vunpack.c.l.b16 %v31
  %v595 = vunpack.c.h.b16 %v31
  %v596 = vunpack.c.l.b16 %v32
  %v597 = vunpack.c.l.b16 %v33
  %v598 = vunpack.c.h.b16 %v33
  %v599 = vunpack.c.l.b16 %v34
  %v600 = vunpack.c.l.b16 %v35
  %v601 = vunpack.c.h.b16 %v35
  %v602 = vunpack.c.l.b16 %v36
  %v603 = vunpack.c.l.b16 %v37
  %v604 = vunpack.c.h.b16 %v37
  %v605 = vunpack.c.l.b16 %v38
  %v606 = vunpack.c.l.b16 %v39
  %v607 = vunpack.c.h.b16 %v39
  %v608 = vunpack.c.l.b16 %v40
  %v609 = vunpack.c.l.b16 %v41
  %v610 = vunpack.c.h.b16 %v41
  %v611 = vunpack.c.l.b16 %v42
  %v612 = vunpack.c.l.b16 %v43
  %v613 = vunpack.c.h.b16 %v43
  %v614 = vunpack.c.l.b16 %v44
  %v615 = vunpack.c.l.b16 %v45
  %v616 = vunpack.c.h.b16 %v45
  %v617 = vunpack.c.l.b16 %v46
  %v618 = vunpack.c.l.b16 %v47
  %v619 = vunpack.c.h.b16 %v47
  %v620 = vunpack.c.l.b16 %v48
  %v621 = vunpack.c.l.b16 %v49
  %v622 = vunpack.c.h.b16 %v49
  %v623 = vunpack.c.l.b16 %v50
  %v624 = vunpack.c.l.b16 %v51
  %v625 = vunpack.c.h.b16 %v51
  %v626 = vunpack.c.l.b16 %v52
  %v627 = vunpack.c.l.b16 %v53
  %v628 = vunpack.c.h.b16 %v53
  %v629 = vunpack.c.l.b16 %v54
  %v630 = vunpack.c.l.b16 %v55
  %v631 = vunpack.c.h.b16 %v55
  %v632 = vunpack.c.l.b16 %v56
  %v633 = vunpack.c.l.b16 %v57
  %v634 = vunpack.c.h.b16 %v57
  %v635 = vunpack.c.l.b16 %v58
  %v636 = vunpack.c.l.b16 %v59
  %v637 = vunpack.c.h.b16 %v59
  %v638 = vunpack.c.l.b16 %v60
  %v639 = vunpack.c.l.b16 %v61
  %v640 = vunpack.c.h.b16 %v61
  %v641 = vunpack.c.l.b16 %v62
  %v642 = vunpack.c.l.b16 %v63
  %v643 = vunpack.c.h.b16 %v63
  %v644 = vunpack.c.l.b16 %v64
  %v645 = vunpack.c.l.b16 %v65
  %v646 = vunpack.c.h.b16 %v65
  %v647 = vunpack.c.l.b16 %v66
  %v648 = vunpack.c.l.b16 %v67
  %v649 = vunpack.c.h.b16 %v67
  %v650 = vunpack.c.l.b16 %v68
  %v651 = vunpack.c.l.b16 %v69
  %v652 = vunpack.c.h.b16 %v69
  %v653 = vunpack.c.l.b16 %v70
  %v654 = vunpack.c.l.b16 %v71
  %v655 = vunpack.c.h.b16 %v71
  %v656 = vunpack.c.l.b16 %v72
  %v657 = vunpack.c.l.b16 %v73
  %v658 = vunpack.c.h.b16 %v73
  %v659 = vunpack.c.l.b16 %v74
  %v660 = vunpack.c.l.b16 %v75
  %v661 = vunpack.c.h.b16 %v75
  %v662 = vunpack.c.l.b16 %v76
  %v663 = vunpack.c.l.b16 %v77
  %v664 = vunpack.c.h.b16 %v77
  %v665 = vunpack.c.l.b16 %v78
  %v666 = vunpack.c.l.b16 %v79
  %v667 = vunpack.c.h.b16 %v79
  %v668 = vunpack.c.l.b16 %v80
  %v669 = vunpack.c.l.b16 %v81
  %v670 = vunpack.c.h.b16 %v81
  %v671 = vunpack.c.l.b16 %v82
  %v672 = vunpack.c.l.b16 %v83
  %v673 = vunpack.c.h.b16 %v83
  %v674 = vunpack.c.l.b16 %v84
  %v675 = vunpack.c.l.b16 %v85
  %v676 = vunpack.c.h.b16 %v85
  %v677 = vunpack.c.l.b16 %v86
  %v678 = vunpack.c.l.b16 %v87
  %v679 = vunpack.c.h.b16 %v87
  %v680 = vunpack.c.l.b16 %v88
  %v681 = vunpack.c.l.b16 %v89
  %v682 = vunpack.c.h.b16 %v89
  %v683 = vunpack.c.l.b16 %v90
  %v684 = vunpack.c.l.b16 %v91
  %v685 = vunpack.c.h.b16 %v91
  %v686 = vunpack.c.l.b16 %v92
  %v687 = vunpack.c.l.b16 %v93
  %v688 = vunpack.c.h.b16 %v93
  %v689 = vunpack.c.l.b16 %v94
  %v690 = vunpack.c.l.b16 %v95
  %v691 = vunpack.c.h.b16 %v95
  %v692 = vunpack.c.l.b16 %v96
  %v693 = vunpack.c.l.b16 %v97
  %v694 = vunpack.c.h.b16 %v97
  %v695 = vunpack.c.l.b16 %v98
  %v696 = vunpack.c.l.b16 %v99
  %v697 = vunpack.c.h.b16 %v99
  %v698 = vunpack.c.l.b16 %v100
  %v699 = vunpack.c.l.b16 %v101
  %v700 = vunpack.c.h.b16 %v101
  %v701 = vunpack.c.l.b16 %v102
  %v702 = vunpack.c.l.b16 %v103
  %v703 = vunpack.c.h.b16 %v103
  %v704 = vunpack.c.l.b16 %v104
  %v705 = vunpack.c.l.b16 %v105
  %v706 = vunpack.c.h.b16 %v105
  %v707 = vunpack.c.l.b16 %v106
  %v708 = vunpack.c.l.b16 %v107
  %v709 = vunpack.c.h.b16 %v107
  %v710 = vunpack.c.l.b16 %v108
  %v711 = vunpack.c.l.b16 %v109
  %v712 = vunpack.c.h.b16 %v109
  %v713 = vunpack.c.l.b16 %v110
  %v714 = vunpack.c.l.b16 %v111
  %v715 = vunpack.c.h.b16 %v111
  %v716 = vunpack.c.l.b16 %v112
  %v717 = vunpack.c.l.b16 %v113
  %v718 = vunpack.c.h.b16 %v113
  %v719 = vunpack.c.l.b16 %v114
  %v720 = vunpack.c.l.b16 %v115
  %v721 = vunpack.c.h.b16 %v115
  %v722 = vunpack.c.l.b16 %v116
  %v723 = vunpack.c.l.b16 %v117
  %v724 = vunpack.c.h.b16 %v117
  %v725 = vunpack.c.l.b16 %v118
  %v726 = vunpack.c.l.b16 %v119
  %v727 = vunpack.c.h.b16 %v119
  %v728 = vunpack.c.l.b16 %v120
  %v729 = vunpack.c.l.b16 %v121
  %v730 = vunpack.c.h.b16 %v121
  %v731 = vunpack.c.l.b16 %v122
  %v732 = vunpack.c.l.b16 %v123
  %v733 = vunpack.c.h.b16 %v123
  %v734 = vunpack.c.l.b16 %v124
  %v735 = vunpack.c.l.b16 %v125
  %v736 = vunpack.c.h.b16 %v125
  %v737 = vunpack.c.l.b16 %v126
  %v738 = vunpack.c.l.b16 %v127
  %v739 = vunpack.c.h.b16 %v127
  %v740 = vunpack.c.l.b16 %v128
  %v741 = vunpack.c.l.b16 %v129
  %v742 = vunpack.c.h.b16 %v129
  %v743 = vunpack.c.l.b16 %v130
  %v744 = vunpack.c.l.b16 %v131
  %v745 = vunpack.c.h.b16 %v131
  %v746 = vunpack.c.l.b16 %v132
  %v747 = vunpack.c.l.b16 %v133
  %v748 = vunpack.c.h.b16 %v133
  %v749 = vunpack.c.l.b16 %v134
  %v750 = vunpack.c.l.b16 %v135
  %v751 = vunpack.c.h.b16 %v135
  %v752 = vunpack.c.l.b16 %v136
  %v753 = vunpack.c.l.b16 %v137
  %v754 = vunpack.c.h.b16 %v137
  %v755 = vunpack.c.l.b16 %v138
  %v756 = vunpack.c.l.b16 %v139
  %v757 = vunpack.c.h.b16 %v139
  %v758 = vunpack.c.l.b16 %v140
  %v759 = vunpack.c.l.b16 %v141
  %v760 = vunpack.c.h.b16 %v141
  %v761 = vunpack.c.l.b16 %v142
  %v762 = vunpack.c.l.b16 %v143
  %v763 = vunpack.c.h.b16 %v143
  %v764 = vunpack.c.l.b16 %v144
  %v765 = vunpack.c.l.b16 %v145
  %v766 = vunpack.c.h.b16 %v145
  %v767 = vunpack.c.l.b16 %v146
  %v768 = vunpack.c.l.b16 %v147
  %v769 = vunpack.c.h.b16 %v147
  %v770 = vunpack.c.l.b16 %v148
  %v771 = vunpack.c.l.b16 %v149
  %v772 = vunpack.c.h.b16 %v149
  %v773 = vunpack.c.l.b16 %v150
  %v774 = vunpack.c.l.b16 %v151
  %v775 = vunpack.c.h.b16 %v151
  %v776 = vunpack.c.l.b16 %v152
  %v777 = vunpack.c.l.b16 %v153
  %v778 = vunpack.c.h.b16 %v153
  %v779 = vunpack.c.l.b16 %v154
  %v780 = vunpack.c.l.b16 %v155
  %v781 = vunpack.c.h.b16 %v155
  %v782 = vunpack.c.l.b16 %v156
  %v783 = vunpack.c.l.b16 %v157
  %v784 = vunpack.c.h.b16 %v157
  %v785 = vunpack.c.l.b16 %v158
  %v786 = vunpack.c.l.b16 %v159
  %v787 = vunpack.c.h.b16 %v159
  %v788 = vunpack.c.l.b16 %v160
  %v789 = vunpack.c.l.b16 %v161
  %v790 = vunpack.c.h.b16 %v161
  %v791 = vunpack.c.l.b16 %v162
  %v792 = vunpack.c.l.b16 %v163
  %v793 = vunpack.c.h.b16 %v163
  %v794 = vunpack.c.l.b16 %v164
  %v795 = vunpack.c.l.b16 %v165
  %v796 = vunpack.c.h.b16 %v165
  %v797 = vunpack.c.l.b16 %v166
  %v798 = vunpack.c.l.b16 %v167
  %v799 = vunpack.c.h.b16 %v167
  %v800 = vunpack.c.l.b16 %v168
  %v801 = vunpack.c.l.b16 %v169
  %v802 = vunpack.c.h.b16 %v169
  %v803 = vunpack.c.l.b16 %v170
  %v804 = vunpack.c.l.b16 %v171
  %v805 = vunpack.c.h.b16 %v171
  %v806 = vunpack.c.l.b16 %v172
  %v807 = vunpack.c.l.b16 %v173
  %v808 = vunpack.c.h.b16 %v173
  %v809 = vunpack.c.l.b16 %v174
  %v810 = vunpack.c.l.b16 %v175
  %v811 = vunpack.c.h.b16 %v175
  %v812 = vunpack.c.l.b16 %v176
  %v813 = vunpack.c.l.b16 %v177
  %v814 = vunpack.c.h.b16 %v177
  %v815 = vunpack.c.l.b16 %v178
  %v816 = vunpack.c.l.b16 %v179
  %v817 = vunpack.c.h.b16 %v179
  %v818 = vunpack.c.l.b16 %v180
  %v819 = vunpack.c.l.b16 %v181
  %v820 = vunpack.c.h.b16 %v181
  %v821 = vunpack.c.l.b16 %v182
  %v822 = vunpack.c.l.b16 %v183
  %v823 = vunpack.c.h.b16 %v183
  %v824 = vunpack.c.l.b16 %v184
  %v825 = vunpack.c.l.b16 %v185
  %v826 = vunpack.c.h.b16 %v185
  %v827 = vunpack.c.l.b16 %v186
  %v828 = vunpack.c.l.b16 %v187
  %v829 = vunpack.c.h.b16 %v187
  %v830 = vunpack.c.l.b16 %v188
  %v831 = vunpack.c.l.b16 %v189
  %v832 = vunpack.c.h.b16 %v189
  %v833 = vunpack.c.l.b16 %v190
  %v834 = vunpack.c.l.b16 %v191
  %v835 = vunpack.c.h.b16 %v191
  %v836 = vunpack.c.l.b16 %v192
  %v837 = vunpack.c.l.b16 %v193
  %v838 = vunpack.c.h.b16 %v193
  %v839 = vunpack.c.l.b16 %v194
  %v840 = vunpack.c.l.b16 %v195
  %v841 = vunpack.c.h.b16 %v195
  %v842 = vunpack.c.l.b16 %v196
  %v843 = vunpack.c.l.b16 %v197
  %v844 = vunpack.c.h.b16 %v197
  %v845 = vunpack.c.l.b16 %v198
  %v846 = vunpack.c.l.b16 %v199
  %v847 = vunpack.c.h.b16 %v199
  %v848 = vunpack.c.l.b16 %v200
  %v849 = vunpack.c.l.b16 %v201
  %v850 = vunpack.c.h.b16 %v201
  %v851 = vunpack.c.l.b16 %v202
  %v852 = vunpack.c.l.b16 %v203
  %v853 = vunpack.c.h.b16 %v203
  %v854 = vunpack.c.l.b16 %v204
  %v855 = vunpack.c.l.b16 %v205
  %v856 = vunpack.c.h.b16 %v205
  %v857 = vunpack.c.l.b16 %v206
  %v858 = vunpack.c.l.b16 %v207
  %v859 = vunpack.c.h.b16 %v207
  %v860 = vunpack.c.l.b16 %v208
  %v861 = vunpack.c.l.b16 %v209
  %v862 = vunpack.c.h.b16 %v209
  %v863 = vunpack.c.l.b16 %v210
  %v864 = vunpack.c.l.b16 %v211
  %v865 = vunpack.c.h.b16 %v211
  %v866 = vunpack.c.l.b16 %v212
  %v867 = vunpack.c.l.b16 %v213
  %v868 = vunpack.c.h.b16 %v213
  %v869 = vunpack.c.l.b16 %v214
  %v870 = vunpack.c.l.b16 %v215
  %v871 = vunpack.c.h.b16 %v215
  %v872 = vunpack.c.l.b16 %v216
  %v873 = vunpack.c.l.b16 %v217
  %v874 = vunpack.c.h.b16 %v217
  %v875 = vunpack.c.l.b16 %v218
  %v876 = vunpack.c.l.b16 %v219
  %v877 = vunpack.c.h.b16 %v219
  %v878 = vunpack.c.l.b16 %v220
  %v879 = vunpack.c.l.b16 %v221
  %v880 = vunpack.c.h.b16 %v221
  %v881 = vunpack.c.l.b16 %v222
  %v882 = vunpack.c.l.b16 %v223
  %v883 = vunpack.c.h.b16 %v223
  %v884 = vunpack.c.l.b16 %v224
  %v885 = vunpack.c.l.b16 %v225
  %v886 = vunpack.c.h.b16 %v225
  %v887 = vunpack.c.l.b16 %v226
  %v888 = vunpack.c.l.b16 %v227
  %v889 = vunpack.c.h.b16 %v227
  %v890 = vunpack.c.l.b16 %v228
  %v891 = vunpack.c.l.b16 %v229
  %v892 = vunpack.c.h.b16 %v229
  %v893 = vunpack.c.l.b16 %v230
  %v894 = vunpack.c.l.b16 %v231
  %v895 = vunpack.c.h.b16 %v231
  %v896 = vunpack.c.l.b16 %v232
  %v897 = vunpack.c.l.b16 %v233
  %v898 = vunpack.c.h.b16 %v233
  %v899 = vunpack.c.l.b16 %v234
  %v900 = vunpack.c.l.b16 %v235
  %v901 = vunpack.c.h.b16 %v235
  %v902 = vunpack.c.l.b16 %v236
  %v903 = vunpack.c.l.b16 %v237
  %v904 = vunpack.c.h.b16 %v237
  %v905 = vunpack.c.l.b16 %v238
  %v906 = vunpack.c.l.b16 %v239
  %v907 = vunpack.c.h.b16 %v239
  %v908 = vunpack.c.l.b16 %v240
  %v909 = vunpack.c.l.b16 %v241
  %v910 = vunpack.c.h.b16 %v241
  %v911 = vunpack.c.l.b16 %v242
  %v912 = vunpack.c.l.b16 %v243
  %v913 = vunpack.c.h.b16 %v243
  %v914 = vunpack.c.l.b16 %v244
  %v915 = vunpack.c.l.b16 %v245
  %v916 = vunpack.c.h.b16 %v245
  %v917 = vunpack.c.l.b16 %v246
  %v918 = vunpack.c.l.b16 %v247
  %v919 = vunpack.c.h.b16 %v247
  %v920 = vunpack.c.l.b16 %v248
  %v921 = vunpack.c.l.b16 %v249
  %v922 = vunpack.c.h.b16 %v249
  %v923 = vunpack.c.l.b16 %v250
  %v924 = vunpack.c.l.b16 %v251
  %v925 = vunpack.c.h.b16 %v251
  %v926 = vunpack.c.l.b16 %v252
  %v927 = vunpack.c.l.b16 %v253
  %v928 = vunpack.c.h.b16 %v253
  %v929 = vunpack.c.l.b16 %v254
  %v930 = vunpack.c.l.b16 %v255
  %v931 = vunpack.c.h.b16 %v255
  %v932 = vunpack.c.l.b16 %v256
  %v933 = vunpack.c.l.b16 %v257
  %v934 = vunpack.c.h.b16 %v257
  %v935 = vunpack.c.l.b16 %v258
  %v936 = vunpack.c.l.b16 %v259
  %v937 = vunpack.c.h.b16 %v259
  %v938 = vunpack.c.l.b16 %v260
  %v939 = vunpack.c.l.b16 %v261
  %v940 = vunpack.c.h.b16 %v261
  %v941 = vunpack.c.l.b16 %v262
  %v942 = vunpack.c.l.b16 %v263
  %v943 = vunpack.c.h.b16 %v263
  %v944 = vunpack.c.l.b16 %v264
  %v945 = vunpack.c.l.b16 %v265
  %v946 = vunpack.c.h.b16 %v265
  %v947 = vunpack.c.l.b16 %v266
  %v948 = vunpack.c.l.b16 %v267
  %v949 = vunpack.c.h.b16 %v267
  %v950 = vunpack.c.l.b16 %v268
  %v951 = vunpack.c.l.b16 %v269
  %v952 = vunpack.c.h.b16 %v269
  %v953 = vunpack.c.l.b16 %v270
  %v954 = vunpack.c.l.b16 %v271
  %v955 = vunpack.c.h.b16 %v271
  %v956 = vunpack.c.l.b16 %v272
  %v957 = vunpack.c.l.b16 %v273
  %v958 = vunpack.c.h.b16 %v273
  %v959 = vunpack.c.l.b16 %v274
  %v960 = vunpack.c.l.b16 %v275
  %v961 = vunpack.c.h.b16 %v275
  %v962 = vunpack.c.l.b16 %v276
  %v963 = vunpack.c.l.b16 %v277
  %v964 = vunpack.c.h.b16 %v277
  %v965 = vunpack.c.l.b16 %v278
  %v966 = vunpack.c.l.b16 %v279
  %v967 = vunpack.c.h.b16 %v279
  %v968 = vunpack.c.l.b16 %v280
  %v969 = vpack.c.b16 %v588, %v585
  %v970 = vpack.c.b16 %v589, %v586
  %v971 = vpack.c.b16 %v590, %v587
  %v972 = vpack.c.b16 %v594, %v591
  %v973 = vpack.c.b16 %v595, %v592
  %v974 = vpack.c.b16 %v596, %v593
  %v975 = vpack.c.b16 %v600, %v597
  %v976 = vpack.c.b16 %v601, %v598
  %v977 = vpack.c.b16 %v602, %v599
  %v978 = vpack.c.b16 %v606, %v603
  %v979 = vpack.c.b16 %v607, %v604
  %v980 = vpack.c.b16 %v608, %v605
  %v981 = vpack.c.b16 %v612, %v609
  %v982 = vpack.c.b16 %v613, %v610
  %v983 = vpack.c.b16 %v614, %v611
  %v984 = vpack.c.b16 %v618, %v615
  %v985 = vpack.c.b16 %v619, %v616
  %v986 = vpack.c.b16 %v620, %v617
  %v987 = vpack.c.b16 %v624, %v621
  %v988 = vpack.c.b16 %v625, %v622
  %v989 = vpack.c.b16 %v626, %v623
  %v990 = vpack.c.b16 %v630, %v627
  %v991 = vpack.c.b16 %v631, %v628
  %v992 = vpack.c.b16 %v632, %v629
  %v993 = vpack.c.b16 %v636, %v633
  %v994 = vpack.c.b16 %v637, %v634
  %v995 = vpack.c.b16 %v638, %v635
  %v996 = vpack.c.b16 %v642, %v639
  %v997 = vpack.c.b16 %v643, %v640
  %v998 = vpack.c.b16 %v644, %v641
  %v999 = vpack.c.b16 %v648, %v645
  %v1000 = vpack.c.b16 %v649, %v646
  %v1001 = vpack.c.b16 %v650, %v647
  %v1002 = vpack.c.b16 %v654, %v651
  %v1003 = vpack.c.b16 %v655, %v652
  %v1004 = vpack.c.b16 %v656, %v653
  %v1005 = vpack.c.b16 %v660, %v657
  %v1006 = vpack.c.b16 %v661, %v658
  %v1007 = vpack.c.b16 %v662, %v659
  %v1008 = vpack.c.b16 %v666, %v663
  %v1009 = vpack.c.b16 %v667, %v664
  %v1010 = vpack.c.b16 %v668, %v665
  %v1011 = vpack.c.b16 %v672, %v669
  %v1012 = vpack.c.b16 %v673, %v670
  %v1013 = vpack.c.b16 %v674, %v671
  %v1014 = vpack.c.b16 %v678, %v675
  %v1015 = vpack.c.b16 %v679, %v676
  %v1016 = vpack.c.b16 %v680, %v677
  %v1017 = vpack.c.b16 %v684, %v681
  %v1018 = vpack.c.b16 %v685, %v682
  %v1019 = vpack.c.b16 %v686, %v683
  %v1020 = vpack.c.b16 %v690, %v687
  %v1021 = vpack.c.b16 %v691, %v688
  %v1022 = vpack.c.b16 %v692, %v689
  %v1023 = vpack.c.b16 %v696, %v693
  %v1024 = vpack.c.b16 %v697, %v694
  %v1025 = vpack.c.b16 %v698, %v695
  %v1026 = vpack.c.b16 %v702, %v699
  %v1027 = vpack.c.b16 %v703, %v700
  %v1028 = vpack.c.b16 %v704, %v701
  %v1029 = vpack.c.b16 %v708, %v705
  %v1030 = vpack.c.b16 %v709, %v706
  %v1031 = vpack.c.b16 %v710, %v707
  %v1032 = vpack.c.b16 %v714, %v711
  %v1033 = vpack.c.b16 %v715, %v712
  %v1034 = vpack.c.b16 %v716, %v713
  %v1035 = vpack.c.b16 %v720, %v717
  %v1036 = vpack.c.b16 %v721, %v718
  %v1037 = vpack.c.b16 %v722, %v719
  %v1038 = vpack.c.b16 %v726, %v723
  %v1039 = vpack.c.b16 %v727, %v724
  %v1040 = vpack.c.b16 %v728, %v725
  %v1041 = vpack.c.b16 %v732, %v729
  %v1042 = vpack.c.b16 %v733, %v730
  %v1043 = vpack.c.b16 %v734, %v731
  %v1044 = vpack.c.b16 %v738, %v735
  %v1045 = vpack.c.b16 %v739, %v736
  %v1046 = vpack.c.b16 %v740, %v737
  %v1047 = vpack.c.b16 %v744, %v741
  %v1048 = vpack.c.b16 %v745, %v742
  %v1049 = vpack.c.b16 %v746, %v743
  %v1050 = vpack.c.b16 %v750, %v747
  %v1051 = vpack.c.b16 %v751, %v748
  %v1052 = vpack.c.b16 %v752, %v749
  %v1053 = vpack.c.b16 %v756, %v753
  %v1054 = vpack.c.b16 %v757, %v754
  %v1055 = vpack.c.b16 %v758, %v755
  %v1056 = vpack.c.b16 %v762, %v759
  %v1057 = vpack.c.b16 %v763, %v760
  %v1058 = vpack.c.b16 %v764, %v761
  %v1059 = vpack.c.b16 %v768, %v765
  %v1060 = vpack.c.b16 %v769, %v766
  %v1061 = vpack.c.b16 %v770, %v767
  %v1062 = vpack.c.b16 %v774, %v771
  %v1063 = vpack.c.b16 %v775, %v772
  %v1064 = vpack.c.b16 %v776, %v773
  %v1065 = vpack.c.b16 %v780, %v777
  %v1066 = vpack.c.b16 %v781, %v778
  %v1067 = vpack.c.b16 %v782, %v779
  %v1068 = vpack.c.b16 %v786, %v783
  %v1069 = vpack.c.b16 %v787, %v784
  %v1070 = vpack.c.b16 %v788, %v785
  %v1071 = vpack.c.b16 %v792, %v789
  %v1072 = vpack.c.b16 %v793, %v790
  %v1073 = vpack.c.b16 %v794, %v791
  %v1074 = vpack.c.b16 %v798, %v795
  %v1075 = vpack.c.b16 %v799, %v796
  %v1076 = vpack.c.b16 %v800, %v797
  %v1077 = vpack.c.b16 %v804, %v801
  %v1078 = vpack.c.b16 %v805, %v802
  %v1079 = vpack.c.b16 %v806, %v803
  %v1080 = vpack.c.b16 %v810, %v807
  %v1081 = vpack.c.b16 %v811, %v808
  %v1082 = vpack.c.b16 %v812, %v809
  %v1083 = vpack.c.b16 %v816, %v813
  %v1084 = vpack.c.b16 %v817, %v814
  %v1085 = vpack.c.b16 %v818, %v815
  %v1086 = vpack.c.b16 %v822, %v819
  %v1087 = vpack.c.b16 %v823, %v820
  %v1088 = vpack.c.b16 %v824, %v821
  %v1089 = vpack.c.b16 %v828, %v825
  %v1090 = vpack.c.b16 %v829, %v826
  %v1091 = vpack.c.b16 %v830, %v827
  %v1092 = vpack.c.b16 %v834, %v831
  %v1093 = vpack.c.b16 %v835, %v832
  %v1094 = vpack.c.b16 %v836, %v833
  %v1095 = vpack.c.b16 %v840, %v837
  %v1096 = vpack.c.b16 %v841, %v838
  %v1097 = vpack.c.b16 %v842, %v839
  %v1098 = vpack.c.b16 %v846, %v843
  %v1099 = vpack.c.b16 %v847, %v844
  %v1100 = vpack.c.b16 %v848, %v845
  %v1101 = vpack.c.b16 %v852, %v849
  %v1102 = vpack.c.b16 %v853, %v850
  %v1103 = vpack.c.b16 %v854, %v851
  %v1104 = vpack.c.b16 %v858, %v855
  %v1105 = vpack.c.b16 %v859, %v856
  %v1106 = vpack.c.b16 %v860, %v857
  %v1107 = vpack.c.b16 %v864, %v861
  %v1108 = vpack.c.b16 %v865, %v862
  %v1109 = vpack.c.b16 %v866, %v863
  %v1110 = vpack.c.b16 %v870, %v867
  %v1111 = vpack.c.b16 %v871, %v868
  %v1112 = vpack.c.b16 %v872, %v869
  %v1113 = vpack.c.b16 %v876, %v873
  %v1114 = vpack.c.b16 %v877, %v874
  %v1115 = vpack.c.b16 %v878, %v875
  %v1116 = vpack.c.b16 %v882, %v879
  %v1117 = vpack.c.b16 %v883, %v880
  %v1118 = vpack.c.b16 %v884, %v881
  %v1119 = vpack.c.b16 %v888, %v885
  %v1120 = vpack.c.b16 %v889, %v886
  %v1121 = vpack.c.b16 %v890, %v887
  %v1122 = vpack.c.b16 %v894, %v891
  %v1123 = vpack.c.b16 %v895, %v892
  %v1124 = vpack.c.b16 %v896, %v893
  %v1125 = vpack.c.b16 %v900, %v897
  %v1126 = vpack.c.b16 %v901, %v898
  %v1127 = vpack.c.b16 %v902, %v899
  %v1128 = vpack.c.b16 %v906, %v903
  %v1129 = vpack.c.b16 %v907, %v904
  %v1130 = vpack.c.b16 %v908, %v905
  %v1131 = vpack.c.b16 %v912, %v909
  %v1132 = vpack.c.b16 %v913, %v910
  %v1133 = vpack.c.b16 %v914, %v911
  %v1134 = vpack.c.b16 %v918, %v915
  %v1135 = vpack.c.b16 %v919, %v916
  %v1136 = vpack.c.b16 %v920, %v917
  %v1137 = vpack.c.b16 %v924, %v921
  %v1138 = vpack.c.b16 %v925, %v922
  %v1139 = vpack.c.b16 %v926, %v923
  %v1140 = vpack.c.b16 %v930, %v927
  %v1141 = vpack.c.b16 %v931, %v928
  %v1142 = vpack.c.b16 %v932, %v929
  %v1143 = vpack.c.b16 %v936, %v933
  %v1144 = vpack.c.b16 %v937, %v934
  %v1145 = vpack.c.b16 %v938, %v935
  %v1146 = vpack.c.b16 %v942, %v939
  %v1147 = vpack.c.b16 %v943, %v940
  %v1148 = vpack.c.b16 %v944, %v941
  %v1149 = vpack.c.b16 %v948, %v945
  %v1150 = vpack.c.b16 %v949, %v946
  %v1151 = vpack.c.b16 %v950, %v947
  %v1152 = vpack.c.b16 %v954, %v951
  %v1153 = vpack.c.b16 %v955, %v952
  %v1154 = vpack.c.b16 %v956, %v953
  %v1155 = vpack.c.b16 %v960, %v957
  %v1156 = vpack.c.b16 %v961, %v958
  %v1157 = vpack.c.b16 %v962, %v959
  %v1158 = vpack.c.b16 %v966, %v963
  %v1159 = vpack.c.b16 %v967, %v964
  %v1160 = vpack.c.b16 %v968, %v965
  %1353 = vmatpush.bf16.msra.mxu0 %v990
  %1354 = vmatpush.bf16.msra.mxu0 %v987
  %1355 = vmatpush.bf16.msra.mxu0 %v984
  %1356 = vmatpush.bf16.msra.mxu0 %v981
  %1357 = vmatpush.bf16.msra.mxu0 %v978
  %1358 = vmatpush.bf16.msra.mxu0 %v975
  %1359 = vmatpush.bf16.msra.mxu0 %v972
  %1360 = vmatpush.bf16.msra.mxu0 %v969
  %1361 = vmatmul.bf16.gmra.mxu0 %v313
  %v1362 = vpop.f32.mrf.mxu0
  %v1363 = vadd.f32 %v283, %v1362
  %v1364 = vpop.f32.mrf.mxu0
  %v1365 = vadd.f32 %v283, %v1364
  %1366 = vdwg.mxu0
  %1367 = vmatpush.bf16.msra.mxu0 %v1014
  %1368 = vmatpush.bf16.msra.mxu0 %v1011
  %1369 = vmatpush.bf16.msra.mxu0 %v1008
  %1370 = vmatpush.bf16.msra.mxu0 %v1005
  %1371 = vmatpush.bf16.msra.mxu0 %v1002
  %1372 = vmatpush.bf16.msra.mxu0 %v999
  %1373 = vmatpush.bf16.msra.mxu0 %v996
  %1374 = vmatpush.bf16.msra.mxu0 %v993
  %1375 = vmatmul.bf16.gmra.mxu0 %v314
  %v1376 = vpop.f32.mrf.mxu0
  %v1377 = vadd.f32 %v1363, %v1376
  %v1378 = vpop.f32.mrf.mxu0
  %v1379 = vadd.f32 %v1365, %v1378
  %1380 = vdwg.mxu0
  %1381 = vmatpush.bf16.msra.mxu0 %v1038
  %1382 = vmatpush.bf16.msra.mxu0 %v1035
  %1383 = vmatpush.bf16.msra.mxu0 %v1032
  %1384 = vmatpush.bf16.msra.mxu0 %v1029
  %1385 = vmatpush.bf16.msra.mxu0 %v1026
  %1386 = vmatpush.bf16.msra.mxu0 %v1023
  %1387 = vmatpush.bf16.msra.mxu0 %v1020
  %1388 = vmatpush.bf16.msra.mxu0 %v1017
  %1389 = vmatmul.bf16.gmra.mxu0 %v315
  %v1390 = vpop.f32.mrf.mxu0
  %v1391 = vadd.f32 %v1377, %v1390
  %v1392 = vpop.f32.mrf.mxu0
  %v1393 = vadd.f32 %v1379, %v1392
  %1394 = vdwg.mxu0
  %1395 = vmatpush.bf16.msra.mxu0 %v1062
  %1396 = vmatpush.bf16.msra.mxu0 %v1059
  %1397 = vmatpush.bf16.msra.mxu0 %v1056
  %1398 = vmatpush.bf16.msra.mxu0 %v1053
  %1399 = vmatpush.bf16.msra.mxu0 %v1050
  %1400 = vmatpush.bf16.msra.mxu0 %v1047
  %1401 = vmatpush.bf16.msra.mxu0 %v1044
  %1402 = vmatpush.bf16.msra.mxu0 %v1041
  %1403 = vmatmul.bf16.gmra.mxu0 %v316
  %v1404 = vpop.f32.mrf.mxu0
  %v1405 = vadd.f32 %v1391, %v1404
  %v1406 = vpop.f32.mrf.mxu0
  %v1407 = vadd.f32 %v1393, %v1406
  %1408 = vdwg.mxu0
  %1409 = vmatpush.bf16.msra.mxu0 %v1086
  %1410 = vmatpush.bf16.msra.mxu0 %v1083
  %1411 = vmatpush.bf16.msra.mxu0 %v1080
  %1412 = vmatpush.bf16.msra.mxu0 %v1077
  %1413 = vmatpush.bf16.msra.mxu0 %v1074
  %1414 = vmatpush.bf16.msra.mxu0 %v1071
  %1415 = vmatpush.bf16.msra.mxu0 %v1068
  %1416 = vmatpush.bf16.msra.mxu0 %v1065
  %1417 = vmatmul.bf16.gmra.mxu0 %v317
  %v1418 = vpop.f32.mrf.mxu0
  %v1419 = vadd.f32 %v1405, %v1418
  %v1420 = vpop.f32.mrf.mxu0
  %v1421 = vadd.f32 %v1407, %v1420
  %1422 = vdwg.mxu0
  %1423 = vmatpush.bf16.msra.mxu0 %v1110
  %1424 = vmatpush.bf16.msra.mxu0 %v1107
  %1425 = vmatpush.bf16.msra.mxu0 %v1104
  %1426 = vmatpush.bf16.msra.mxu0 %v1101
  %1427 = vmatpush.bf16.msra.mxu0 %v1098
  %1428 = vmatpush.bf16.msra.mxu0 %v1095
  %1429 = vmatpush.bf16.msra.mxu0 %v1092
  %1430 = vmatpush.bf16.msra.mxu0 %v1089
  %1431 = vmatmul.bf16.gmra.mxu0 %v318
  %v1432 = vpop.f32.mrf.mxu0
  %v1433 = vadd.f32 %v1419, %v1432
  %v1434 = vpop.f32.mrf.mxu0
  %v1435 = vadd.f32 %v1421, %v1434
  %1436 = vdwg.mxu0
  %1437 = vmatpush.bf16.msra.mxu0 %v1134
  %1438 = vmatpush.bf16.msra.mxu0 %v1131
  %1439 = vmatpush.bf16.msra.mxu0 %v1128
  %1440 = vmatpush.bf16.msra.mxu0 %v1125
  %1441 = vmatpush.bf16.msra.mxu0 %v1122
  %1442 = vmatpush.bf16.msra.mxu0 %v1119
  %1443 = vmatpush.bf16.msra.mxu0 %v1116
  %1444 = vmatpush.bf16.msra.mxu0 %v1113
  %1445 = vmatmul.bf16.gmra.mxu0 %v319
  %v1446 = vpop.f32.mrf.mxu0
  %v1447 = vadd.f32 %v1433, %v1446
  %v1448 = vpop.f32.mrf.mxu0
  %v1449 = vadd.f32 %v1435, %v1448
  %1450 = vdwg.mxu0
  %1451 = vmatpush.bf16.msra.mxu0 %v1158
  %1452 = vmatpush.bf16.msra.mxu0 %v1155
  %1453 = vmatpush.bf16.msra.mxu0 %v1152
  %1454 = vmatpush.bf16.msra.mxu0 %v1149
  %1455 = vmatpush.bf16.msra.mxu0 %v1146
  %1456 = vmatpush.bf16.msra.mxu0 %v1143
  %1457 = vmatpush.bf16.msra.mxu0 %v1140
  %1458 = vmatpush.bf16.msra.mxu0 %v1137
  %1459 = vmatmul.bf16.gmra.mxu0 %v320
  %v1460 = vpop.f32.mrf.mxu0
  %v1461 = vadd.f32 %v1447, %v1460
  %v1462 = vpop.f32.mrf.mxu0
  %v1463 = vadd.f32 %v1449, %v1462
  %1464 = vdwg.mxu0
  %1465 = vmatpush.bf16.msra.mxu0 %v991
  %1466 = vmatpush.bf16.msra.mxu0 %v988
  %1467 = vmatpush.bf16.msra.mxu0 %v985
  %1468 = vmatpush.bf16.msra.mxu0 %v982
  %1469 = vmatpush.bf16.msra.mxu0 %v979
  %1470 = vmatpush.bf16.msra.mxu0 %v976
  %1471 = vmatpush.bf16.msra.mxu0 %v973
  %1472 = vmatpush.bf16.msra.mxu0 %v970
  %1473 = vmatmul.bf16.gmra.mxu0 %v313
  %v1474 = vpop.f32.mrf.mxu0
  %v1475 = vadd.f32 %v284, %v1474
  %v1476 = vpop.f32.mrf.mxu0
  %v1477 = vadd.f32 %v284, %v1476
  %1478 = vdwg.mxu0
  %1479 = vmatpush.bf16.msra.mxu0 %v1015
  %1480 = vmatpush.bf16.msra.mxu0 %v1012
  %1481 = vmatpush.bf16.msra.mxu0 %v1009
  %1482 = vmatpush.bf16.msra.mxu0 %v1006
  %1483 = vmatpush.bf16.msra.mxu0 %v1003
  %1484 = vmatpush.bf16.msra.mxu0 %v1000
  %1485 = vmatpush.bf16.msra.mxu0 %v997
  %1486 = vmatpush.bf16.msra.mxu0 %v994
  %1487 = vmatmul.bf16.gmra.mxu0 %v314
  %v1488 = vpop.f32.mrf.mxu0
  %v1489 = vadd.f32 %v1475, %v1488
  %v1490 = vpop.f32.mrf.mxu0
  %v1491 = vadd.f32 %v1477, %v1490
  %1492 = vdwg.mxu0
  %1493 = vmatpush.bf16.msra.mxu0 %v1039
  %1494 = vmatpush.bf16.msra.mxu0 %v1036
  %1495 = vmatpush.bf16.msra.mxu0 %v1033
  %1496 = vmatpush.bf16.msra.mxu0 %v1030
  %1497 = vmatpush.bf16.msra.mxu0 %v1027
  %1498 = vmatpush.bf16.msra.mxu0 %v1024
  %1499 = vmatpush.bf16.msra.mxu0 %v1021
  %1500 = vmatpush.bf16.msra.mxu0 %v1018
  %1501 = vmatmul.bf16.gmra.mxu0 %v315
  %v1502 = vpop.f32.mrf.mxu0
  %v1503 = vadd.f32 %v1489, %v1502
  %v1504 = vpop.f32.mrf.mxu0
  %v1505 = vadd.f32 %v1491, %v1504
  %1506 = vdwg.mxu0
  %1507 = vmatpush.bf16.msra.mxu0 %v1063
  %1508 = vmatpush.bf16.msra.mxu0 %v1060
  %1509 = vmatpush.bf16.msra.mxu0 %v1057
  %1510 = vmatpush.bf16.msra.mxu0 %v1054
  %1511 = vmatpush.bf16.msra.mxu0 %v1051
  %1512 = vmatpush.bf16.msra.mxu0 %v1048
  %1513 = vmatpush.bf16.msra.mxu0 %v1045
  %1514 = vmatpush.bf16.msra.mxu0 %v1042
  %1515 = vmatmul.bf16.gmra.mxu0 %v316
  %v1516 = vpop.f32.mrf.mxu0
  %v1517 = vadd.f32 %v1503, %v1516
  %v1518 = vpop.f32.mrf.mxu0
  %v1519 = vadd.f32 %v1505, %v1518
  %1520 = vdwg.mxu0
  %1521 = vmatpush.bf16.msra.mxu0 %v1087
  %1522 = vmatpush.bf16.msra.mxu0 %v1084
  %1523 = vmatpush.bf16.msra.mxu0 %v1081
  %1524 = vmatpush.bf16.msra.mxu0 %v1078
  %1525 = vmatpush.bf16.msra.mxu0 %v1075
  %1526 = vmatpush.bf16.msra.mxu0 %v1072
  %1527 = vmatpush.bf16.msra.mxu0 %v1069
  %1528 = vmatpush.bf16.msra.mxu0 %v1066
  %1529 = vmatmul.bf16.gmra.mxu0 %v317
  %v1530 = vpop.f32.mrf.mxu0
  %v1531 = vadd.f32 %v1517, %v1530
  %v1532 = vpop.f32.mrf.mxu0
  %v1533 = vadd.f32 %v1519, %v1532
  %1534 = vdwg.mxu0
  %1535 = vmatpush.bf16.msra.mxu0 %v1111
  %1536 = vmatpush.bf16.msra.mxu0 %v1108
  %1537 = vmatpush.bf16.msra.mxu0 %v1105
  %1538 = vmatpush.bf16.msra.mxu0 %v1102
  %1539 = vmatpush.bf16.msra.mxu0 %v1099
  %1540 = vmatpush.bf16.msra.mxu0 %v1096
  %1541 = vmatpush.bf16.msra.mxu0 %v1093
  %1542 = vmatpush.bf16.msra.mxu0 %v1090
  %1543 = vmatmul.bf16.gmra.mxu0 %v318
  %v1544 = vpop.f32.mrf.mxu0
  %v1545 = vadd.f32 %v1531, %v1544
  %v1546 = vpop.f32.mrf.mxu0
  %v1547 = vadd.f32 %v1533, %v1546
  %1548 = vdwg.mxu0
  %1549 = vmatpush.bf16.msra.mxu0 %v1135
  %1550 = vmatpush.bf16.msra.mxu0 %v1132
  %1551 = vmatpush.bf16.msra.mxu0 %v1129
  %1552 = vmatpush.bf16.msra.mxu0 %v1126
  %1553 = vmatpush.bf16.msra.mxu0 %v1123
  %1554 = vmatpush.bf16.msra.mxu0 %v1120
  %1555 = vmatpush.bf16.msra.mxu0 %v1117
  %1556 = vmatpush.bf16.msra.mxu0 %v1114
  %1557 = vmatmul.bf16.gmra.mxu0 %v319
  %v1558 = vpop.f32.mrf.mxu0
  %v1559 = vadd.f32 %v1545, %v1558
  %v1560 = vpop.f32.mrf.mxu0
  %v1561 = vadd.f32 %v1547, %v1560
  %1562 = vdwg.mxu0
  %1563 = vmatpush.bf16.msra.mxu0 %v1159
  %1564 = vmatpush.bf16.msra.mxu0 %v1156
  %1565 = vmatpush.bf16.msra.mxu0 %v1153
  %1566 = vmatpush.bf16.msra.mxu0 %v1150
  %1567 = vmatpush.bf16.msra.mxu0 %v1147
  %1568 = vmatpush.bf16.msra.mxu0 %v1144
  %1569 = vmatpush.bf16.msra.mxu0 %v1141
  %1570 = vmatpush.bf16.msra.mxu0 %v1138
  %1571 = vmatmul.bf16.gmra.mxu0 %v320
  %v1572 = vpop.f32.mrf.mxu0
  %v1573 = vadd.f32 %v1559, %v1572
  %v1574 = vpop.f32.mrf.mxu0
  %v1575 = vadd.f32 %v1561, %v1574
  %1576 = vdwg.mxu0
  %1577 = vmatpush.bf16.msra.mxu0 %v992
  %1578 = vmatpush.bf16.msra.mxu0 %v989
  %1579 = vmatpush.bf16.msra.mxu0 %v986
  %1580 = vmatpush.bf16.msra.mxu0 %v983
  %1581 = vmatpush.bf16.msra.mxu0 %v980
  %1582 = vmatpush.bf16.msra.mxu0 %v977
  %1583 = vmatpush.bf16.msra.mxu0 %v974
  %1584 = vmatpush.bf16.msra.mxu0 %v971
  %1585 = vmatmul.bf16.gmra.mxu0 %v313
  %v1586 = vpop.f32.mrf.mxu0
  %v1587 = vadd.f32 %v285, %v1586
  %v1588 = vpop.f32.mrf.mxu0
  %v1589 = vadd.f32 %v285, %v1588
  %1590 = vdwg.mxu0
  %1591 = vmatpush.bf16.msra.mxu0 %v1016
  %1592 = vmatpush.bf16.msra.mxu0 %v1013
  %1593 = vmatpush.bf16.msra.mxu0 %v1010
  %1594 = vmatpush.bf16.msra.mxu0 %v1007
  %1595 = vmatpush.bf16.msra.mxu0 %v1004
  %1596 = vmatpush.bf16.msra.mxu0 %v1001
  %1597 = vmatpush.bf16.msra.mxu0 %v998
  %1598 = vmatpush.bf16.msra.mxu0 %v995
  %1599 = vmatmul.bf16.gmra.mxu0 %v314
  %v1600 = vpop.f32.mrf.mxu0
  %v1601 = vadd.f32 %v1587, %v1600
  %v1602 = vpop.f32.mrf.mxu0
  %v1603 = vadd.f32 %v1589, %v1602
  %1604 = vdwg.mxu0
  %1605 = vmatpush.bf16.msra.mxu0 %v1040
  %1606 = vmatpush.bf16.msra.mxu0 %v1037
  %1607 = vmatpush.bf16.msra.mxu0 %v1034
  %1608 = vmatpush.bf16.msra.mxu0 %v1031
  %1609 = vmatpush.bf16.msra.mxu0 %v1028
  %1610 = vmatpush.bf16.msra.mxu0 %v1025
  %1611 = vmatpush.bf16.msra.mxu0 %v1022
  %1612 = vmatpush.bf16.msra.mxu0 %v1019
  %1613 = vmatmul.bf16.gmra.mxu0 %v315
  %v1614 = vpop.f32.mrf.mxu0
  %v1615 = vadd.f32 %v1601, %v1614
  %v1616 = vpop.f32.mrf.mxu0
  %v1617 = vadd.f32 %v1603, %v1616
  %1618 = vdwg.mxu0
  %1619 = vmatpush.bf16.msra.mxu0 %v1064
  %1620 = vmatpush.bf16.msra.mxu0 %v1061
  %1621 = vmatpush.bf16.msra.mxu0 %v1058
  %1622 = vmatpush.bf16.msra.mxu0 %v1055
  %1623 = vmatpush.bf16.msra.mxu0 %v1052
  %1624 = vmatpush.bf16.msra.mxu0 %v1049
  %1625 = vmatpush.bf16.msra.mxu0 %v1046
  %1626 = vmatpush.bf16.msra.mxu0 %v1043
  %1627 = vmatmul.bf16.gmra.mxu0 %v316
  %v1628 = vpop.f32.mrf.mxu0
  %v1629 = vadd.f32 %v1615, %v1628
  %v1630 = vpop.f32.mrf.mxu0
  %v1631 = vadd.f32 %v1617, %v1630
  %1632 = vdwg.mxu0
  %1633 = vmatpush.bf16.msra.mxu0 %v1088
  %1634 = vmatpush.bf16.msra.mxu0 %v1085
  %1635 = vmatpush.bf16.msra.mxu0 %v1082
  %1636 = vmatpush.bf16.msra.mxu0 %v1079
  %1637 = vmatpush.bf16.msra.mxu0 %v1076
  %1638 = vmatpush.bf16.msra.mxu0 %v1073
  %1639 = vmatpush.bf16.msra.mxu0 %v1070
  %1640 = vmatpush.bf16.msra.mxu0 %v1067
  %1641 = vmatmul.bf16.gmra.mxu0 %v317
  %v1642 = vpop.f32.mrf.mxu0
  %v1643 = vadd.f32 %v1629, %v1642
  %v1644 = vpop.f32.mrf.mxu0
  %v1645 = vadd.f32 %v1631, %v1644
  %1646 = vdwg.mxu0
  %1647 = vmatpush.bf16.msra.mxu0 %v1112
  %1648 = vmatpush.bf16.msra.mxu0 %v1109
  %1649 = vmatpush.bf16.msra.mxu0 %v1106
  %1650 = vmatpush.bf16.msra.mxu0 %v1103
  %1651 = vmatpush.bf16.msra.mxu0 %v1100
  %1652 = vmatpush.bf16.msra.mxu0 %v1097
  %1653 = vmatpush.bf16.msra.mxu0 %v1094
  %1654 = vmatpush.bf16.msra.mxu0 %v1091
  %1655 = vmatmul.bf16.gmra.mxu0 %v318
  %v1656 = vpop.f32.mrf.mxu0
  %v1657 = vadd.f32 %v1643, %v1656
  %v1658 = vpop.f32.mrf.mxu0
  %v1659 = vadd.f32 %v1645, %v1658
  %1660 = vdwg.mxu0
  %1661 = vmatpush.bf16.msra.mxu0 %v1136
  %1662 = vmatpush.bf16.msra.mxu0 %v1133
  %1663 = vmatpush.bf16.msra.mxu0 %v1130
  %1664 = vmatpush.bf16.msra.mxu0 %v1127
  %1665 = vmatpush.bf16.msra.mxu0 %v1124
  %1666 = vmatpush.bf16.msra.mxu0 %v1121
  %1667 = vmatpush.bf16.msra.mxu0 %v1118
  %1668 = vmatpush.bf16.msra.mxu0 %v1115
  %1669 = vmatmul.bf16.gmra.mxu0 %v319
  %v1670 = vpop.f32.mrf.mxu0
  %v1671 = vadd.f32 %v1657, %v1670
  %v1672 = vpop.f32.mrf.mxu0
  %v1673 = vadd.f32 %v1659, %v1672
  %1674 = vdwg.mxu0
  %1675 = vmatpush.bf16.msra.mxu0 %v1160
  %1676 = vmatpush.bf16.msra.mxu0 %v1157
  %1677 = vmatpush.bf16.msra.mxu0 %v1154
  %1678 = vmatpush.bf16.msra.mxu0 %v1151
  %1679 = vmatpush.bf16.msra.mxu0 %v1148
  %1680 = vmatpush.bf16.msra.mxu0 %v1145
  %1681 = vmatpush.bf16.msra.mxu0 %v1142
  %1682 = vmatpush.bf16.msra.mxu0 %v1139
  %1683 = vmatmul.bf16.gmra.mxu0 %v320
  %v1684 = vpop.f32.mrf.mxu0
  %v1685 = vadd.f32 %v1671, %v1684
  %v1686 = vpop.f32.mrf.mxu0
  %v1687 = vadd.f32 %v1673, %v1686
  %1688 = vdwg.mxu0
  %1689 = vmax.xlane.f32.xlu0 %v1461
  %v1690 = vpop.xlane.xlu0 %1689
  %1691 = vmax.xlane.f32.xlu0 %v1463
  %v1692 = vpop.xlane.xlu0 %1691
  %v1693 = vsub.f32 %v1461, %v1690
  %v1694 = vsub.f32 %v1463, %v1692
  %v1695 = vmul.f32 %v1693, 1.442695
  %v1696 = vpow.pop %v1695
  %v1697 = vmul.f32 %v1694, 1.442695
  %v1698 = vpow.pop %v1697
  %1699 = vadd.xlane.f32.xlu0 %v1696
  %v1700 = vpop.xlane.xlu0 %1699
  %1701 = vadd.xlane.f32.xlu0 %v1698
  %v1702 = vpop.xlane.xlu0 %1701
  %v1703 = vlog2.pop %v1700
  %v1704 = vmul.f32 %v1703, 0.6931472
  %v1705 = vlog2.pop %v1702
  %v1706 = vmul.f32 %v1705, 0.6931472
  %v1707 = vsub.f32 %v1693, %v1704
  %v1708 = vsub.f32 %v1694, %v1706
  %1709 = vmax.xlane.f32.xlu0 %v1573
  %v1710 = vpop.xlane.xlu0 %1709
  %1711 = vmax.xlane.f32.xlu0 %v1575
  %v1712 = vpop.xlane.xlu0 %1711
  %v1713 = vsub.f32 %v1573, %v1710
  %v1714 = vsub.f32 %v1575, %v1712
  %v1715 = vmul.f32 %v1713, 1.442695
  %v1716 = vpow.pop %v1715
  %v1717 = vmul.f32 %v1714, 1.442695
  %v1718 = vpow.pop %v1717
  %1719 = vadd.xlane.f32.xlu0 %v1716
  %v1720 = vpop.xlane.xlu0 %1719
  %1721 = vadd.xlane.f32.xlu0 %v1718
  %v1722 = vpop.xlane.xlu0 %1721
  %v1723 = vlog2.pop %v1720
  %v1724 = vmul.f32 %v1723, 0.6931472
  %v1725 = vlog2.pop %v1722
  %v1726 = vmul.f32 %v1725, 0.6931472
  %v1727 = vsub.f32 %v1713, %v1724
  %v1728 = vsub.f32 %v1714, %v1726
  %1729 = vmax.xlane.f32.xlu0 %v1685
  %v1730 = vpop.xlane.xlu0 %1729
  %1731 = vmax.xlane.f32.xlu0 %v1687
  %v1732 = vpop.xlane.xlu0 %1731
  %v1733 = vsub.f32 %v1685, %v1730
  %v1734 = vsub.f32 %v1687, %v1732
  %v1735 = vmul.f32 %v1733, 1.442695
  %v1736 = vpow.pop %v1735
  %v1737 = vmul.f32 %v1734, 1.442695
  %v1738 = vpow.pop %v1737
  %1739 = vadd.xlane.f32.xlu0 %v1736
  %v1740 = vpop.xlane.xlu0 %1739
  %1741 = vadd.xlane.f32.xlu0 %v1738
  %v1742 = vpop.xlane.xlu0 %1741
  %v1743 = vlog2.pop %v1740
  %v1744 = vmul.f32 %v1743, 0.6931472
  %v1745 = vlog2.pop %v1742
  %v1746 = vmul.f32 %v1745, 0.6931472
  %v1747 = vsub.f32 %v1733, %v1744
  %v1748 = vsub.f32 %v1734, %v1746
  %v1749 = vld [vmem:[%s3] sm:$0xff]
  %v1750 = vld [vmem:[%s3 + $0x8] sm:$0xff]
  %v1751 = vld [vmem:[%s3 + $0x10] sm:$0xff]
  %v1752 = vld [vmem:[%s3 + $0x18] sm:$0xff]
  %v1753 = vld [vmem:[%s3 + $0x20] sm:$0xff]
  %v1754 = vld [vmem:[%s3 + $0x28] sm:$0xff]
  %v1755 = vld [vmem:[%s3 + $0x30] sm:$0xff]
  %v1756 = vld [vmem:[%s3 + $0x38] sm:$0xff]
  %v1757 = vld [vmem:[%s3 + $0x40] sm:$0xff]
  %v1758 = vld [vmem:[%s3 + $0x48] sm:$0xff]
  %v1759 = vld [vmem:[%s3 + $0x50] sm:$0xff]
  %v1760 = vld [vmem:[%s3 + $0x58] sm:$0xff]
  %v1761 = vld [vmem:[%s3 + $0x60] sm:$0xff]
  %v1762 = vld [vmem:[%s3 + $0x68] sm:$0xff]
  %v1763 = vld [vmem:[%s3 + $0x70] sm:$0xff]
  %v1764 = vld [vmem:[%s3 + $0x78] sm:$0xff]
  %v1765 = vld [vmem:[%s3 + $0x80] sm:$0xff]
  %v1766 = vld [vmem:[%s3 + $0x88] sm:$0xff]
  %v1767 = vld [vmem:[%s3 + $0x90] sm:$0xff]
  %v1768 = vld [vmem:[%s3 + $0x98] sm:$0xff]
  %v1769 = vld [vmem:[%s3 + $0xa0] sm:$0xff]
  %v1770 = vld [vmem:[%s3 + $0xa8] sm:$0xff]
  %v1771 = vld [vmem:[%s3 + $0xb0] sm:$0xff]
  %v1772 = vld [vmem:[%s3 + $0xb8] sm:$0xff]
  %v1773 = vld [vmem:[%s3 + $0xc0] sm:$0xff]
  %v1774 = vld [vmem:[%s3 + $0xc8] sm:$0xff]
  %v1775 = vld [vmem:[%s3 + $0xd0] sm:$0xff]
  %v1776 = vld [vmem:[%s3 + $0xd8] sm:$0xff]
  %v1777 = vld [vmem:[%s3 + $0xe0] sm:$0xff]
  %v1778 = vld [vmem:[%s3 + $0xe8] sm:$0xff]
  %v1779 = vld [vmem:[%s3 + $0xf0] sm:$0xff]
  %v1780 = vld [vmem:[%s3 + $0xf8] sm:$0xff]
  %v1781 = vld [vmem:[%s3 + $0x100] sm:$0xff]
  %v1782 = vld [vmem:[%s3 + $0x108] sm:$0xff]
  %v1783 = vld [vmem:[%s3 + $0x110] sm:$0xff]
  %v1784 = vld [vmem:[%s3 + $0x118] sm:$0xff]
  %v1785 = vld [vmem:[%s3 + $0x120] sm:$0xff]
  %v1786 = vld [vmem:[%s3 + $0x128] sm:$0xff]
  %v1787 = vld [vmem:[%s3 + $0x130] sm:$0xff]
  %v1788 = vld [vmem:[%s3 + $0x138] sm:$0xff]
  %v1789 = vld [vmem:[%s3 + $0x140] sm:$0xff]
  %v1790 = vld [vmem:[%s3 + $0x148] sm:$0xff]
  %v1791 = vld [vmem:[%s3 + $0x150] sm:$0xff]
  %v1792 = vld [vmem:[%s3 + $0x158] sm:$0xff]
  %v1793 = vld [vmem:[%s3 + $0x160] sm:$0xff]
  %v1794 = vld [vmem:[%s3 + $0x168] sm:$0xff]
  %v1795 = vld [vmem:[%s3 + $0x170] sm:$0xff]
  %v1796 = vld [vmem:[%s3 + $0x178] sm:$0xff]
  %1797 = vmatpush.msra.mxu0 %v1764
  %1798 = vmatpush.msra.mxu0 %v1763
  %1799 = vmatpush.msra.mxu0 %v1762
  %1800 = vmatpush.msra.mxu0 %v1761
  %1801 = vmatpush.msra.mxu0 %v1760
  %1802 = vmatpush.msra.mxu0 %v1759
  %1803 = vmatpush.msra.mxu0 %v1758
  %1804 = vmatpush.msra.mxu0 %v1757
  %1805 = vmatpush.msra.mxu0 %v1756
  %1806 = vmatpush.msra.mxu0 %v1755
  %1807 = vmatpush.msra.mxu0 %v1754
  %1808 = vmatpush.msra.mxu0 %v1753
  %1809 = vmatpush.msra.mxu0 %v1752
  %1810 = vmatpush.msra.mxu0 %v1751
  %1811 = vmatpush.msra.mxu0 %v1750
  %1812 = vmatpush.msra.mxu0 %v1749
  %1813 = vmatmul.f32.gmra.mxu0 %v1707
  %v1814 = vpop.f32.mrf.mxu0
  %v1815 = vadd.f32 0.0, %v1814
  %1816 = vmatmul.f32.gmra.mxu0 %v1708
  %v1817 = vpop.f32.mrf.mxu0
  %v1818 = vadd.f32 0.0, %v1817
  %1819 = vdwg.mxu0
  %1820 = vmatpush.msra.mxu0 %v1780
  %1821 = vmatpush.msra.mxu0 %v1779
  %1822 = vmatpush.msra.mxu0 %v1778
  %1823 = vmatpush.msra.mxu0 %v1777
  %1824 = vmatpush.msra.mxu0 %v1776
  %1825 = vmatpush.msra.mxu0 %v1775
  %1826 = vmatpush.msra.mxu0 %v1774
  %1827 = vmatpush.msra.mxu0 %v1773
  %1828 = vmatpush.msra.mxu0 %v1772
  %1829 = vmatpush.msra.mxu0 %v1771
  %1830 = vmatpush.msra.mxu0 %v1770
  %1831 = vmatpush.msra.mxu0 %v1769
  %1832 = vmatpush.msra.mxu0 %v1768
  %1833 = vmatpush.msra.mxu0 %v1767
  %1834 = vmatpush.msra.mxu0 %v1766
  %1835 = vmatpush.msra.mxu0 %v1765
  %1836 = vmatmul.f32.gmra.mxu0 %v1727
  %v1837 = vpop.f32.mrf.mxu0
  %v1838 = vadd.f32 %v1815, %v1837
  %1839 = vmatmul.f32.gmra.mxu0 %v1728
  %v1840 = vpop.f32.mrf.mxu0
  %v1841 = vadd.f32 %v1818, %v1840
  %1842 = vdwg.mxu0
  %1843 = vmatpush.msra.mxu0 %v1796
  %1844 = vmatpush.msra.mxu0 %v1795
  %1845 = vmatpush.msra.mxu0 %v1794
  %1846 = vmatpush.msra.mxu0 %v1793
  %1847 = vmatpush.msra.mxu0 %v1792
  %1848 = vmatpush.msra.mxu0 %v1791
  %1849 = vmatpush.msra.mxu0 %v1790
  %1850 = vmatpush.msra.mxu0 %v1789
  %1851 = vmatpush.msra.mxu0 %v1788
  %1852 = vmatpush.msra.mxu0 %v1787
  %1853 = vmatpush.msra.mxu0 %v1786
  %1854 = vmatpush.msra.mxu0 %v1785
  %1855 = vmatpush.msra.mxu0 %v1784
  %1856 = vmatpush.msra.mxu0 %v1783
  %1857 = vmatpush.msra.mxu0 %v1782
  %1858 = vmatpush.msra.mxu0 %v1781
  %1859 = vmatmul.f32.gmra.mxu0 %v1747
  %v1860 = vpop.f32.mrf.mxu0
  %v1861 = vadd.f32 %v1838, %v1860
  %1862 = vmatmul.f32.gmra.mxu0 %v1748
  %v1863 = vpop.f32.mrf.mxu0
  %v1864 = vadd.f32 %v1841, %v1863
  %1865 = vdwg.mxu0
  %1866 = vst [vmem:[%s4] sm:$0xff] %v1861
  %1867 = vst [vmem:[%s4 + $0x8] sm:$0xff] %v1864
  // Predicated region
  $region18: #{hierarchical_forward.1} parent=0 // pred_check
    _
  $region19: #{hierarchical_forward.1} parent=0 // pred_check_branch
    %1869 = sbr.rel (0) target = $region21
  $region20: #{hierarchical_forward.1} parent=0 // pred_region
    _
  $region21: #{hierarchical_forward.1} parent=0 // pred_fallthru
    _
  // Predicated region
  $region22: #{hierarchical_forward.1} parent=0 // pred_check
    _
  $region23: #{hierarchical_forward.1} parent=0 // pred_check_branch
    %1871 = sbr.rel (0) target = $region25
  $region24: #{hierarchical_forward.1} parent=0 // pred_region
    _
  $region25: #{hierarchical_forward.1} parent=0 // pred_fallthru
    _

</llo_original>
